<compile_context>
chip_gen: v6e
topology: v6e:2x2x1
jax: 0.10.0
libtpu: 0.0.40
codegen_flags: <defaults>
</compile_context>

<pallas_src>
import functools

import jax
import jax.numpy as jnp
from jax import lax
from jax.experimental import pallas as pl
from jax.experimental.pallas import tpu as pltpu


def _round_up(n, m):
    return ((n + m - 1) // m) * m


def _lstm_fused_kernel(T, B, HP,
                       tok_ref, fused_ref, whh_ref, wlin_ref, blin_ref,
                       h0_ref, c0_ref, out_ref):
    """Whole forward in one invocation; everything lives in VMEM."""
    TB = T * B
    VP = fused_ref.shape[0]                      # padded vocab

    # Fused embedding + input projection + bias: one lane-dense bf16 MXU
    # matmul against the precomputed (VP, 4*HP) table.  One-hot rows sum to 1
    # for in-range tokens, so the folded bias is added exactly once.
    # (Tokens >= V would select an all-zero row and drop the bias; PyTorch's
    #  nn.Embedding would raise instead -- acceptable for trusted inputs.)
    onehot = (tok_ref[...] ==
              lax.broadcasted_iota(jnp.int32, (TB, VP), 1)).astype(jnp.bfloat16)
    gx = jnp.dot(onehot, fused_ref[...],
                 preferred_element_type=jnp.float32)            # (TB, 4*HP) f32

    h = h0_ref[...]                                             # (B, HP) f32
    c = c0_ref[...]                                             # (B, HP) f32

    # Recurrence fully unrolled (T small & static).  Gate blocks are HP(=128)
    # lane-padded, so each slice starts at a 128-lane boundary.
    # (Switch to lax.fori_loop(..., unroll=True) if T ever grows past ~16.)
    hs = []
    for t in range(T):
        # f32 recurrence matmul -> numerical parity with the f32 reference.
        g = gx[t * B:(t + 1) * B, :] + jnp.dot(
            h, whh_ref[...], preferred_element_type=jnp.float32)  # (B, 4*HP)
        i_g = jax.nn.sigmoid(g[:, 0 * HP:1 * HP])
        f_g = jax.nn.sigmoid(g[:, 1 * HP:2 * HP])
        g_g = jnp.tanh(g[:, 2 * HP:3 * HP])
        o_g = jax.nn.sigmoid(g[:, 3 * HP:4 * HP])
        c = f_g * c + i_g * g_g
        h = o_g * jnp.tanh(c)
        hs.append(h)                 # register-resident history (TB*HP f32 = 8 vregs)

    # Output Linear hoisted out of the loop: one bf16 matmul, one lane-dense store.
    hs_all = jnp.concatenate(hs, axis=0)                        # (TB, HP)
    out_ref[...] = (jnp.dot(hs_all.astype(jnp.bfloat16), wlin_ref[...],
                            preferred_element_type=jnp.float32)
                    + blin_ref[...]).astype(out_ref.dtype)


def prepare_padded_params(params):
    """One-time host-side padding / fusion into the kernel's lane-aligned layout.

    Call once at init so the per-call forward has zero padding dispatches.
    """
    emb = params["embedding"].astype(jnp.float32)               # (V, E)
    V, E = emb.shape
    H = params["w_hh_t"].shape[0]
    C = params["w_lin_t"].shape[1]
    HP = _round_up(H, 128)        # per-gate lane-aligned width
    CP = _round_up(C, 128)        # lane-dense output width
    VP = _round_up(V, 128)        # padded vocab for the one-hot matmul

    def pad_gate_cols(w):         # (rows, 4H) -> (rows, 4*HP), exact zeros elsewhere
        out = jnp.zeros((w.shape[0], 4 * HP), jnp.float32)
        for g in range(4):
            out = out.at[:, g * HP:g * HP + H].set(w[:, g * H:(g + 1) * H])
        return out

    wih_p = pad_gate_cols(params["w_ih_t"].astype(jnp.float32))     # (E, 4*HP)
    bias_p = pad_gate_cols(params["bias"].astype(jnp.float32))      # (1, 4*HP)
    # Fused embedding @ W_ih^T + bias table (computed in f32, stored bf16).
    fused = jnp.zeros((VP, 4 * HP), jnp.float32).at[:V, :].set(
        emb @ wih_p + bias_p).astype(jnp.bfloat16)                  # (VP, 4*HP)
    whh_p = jnp.zeros((HP, 4 * HP), jnp.float32).at[:H, :].set(
        pad_gate_cols(params["w_hh_t"].astype(jnp.float32)))        # (HP, 4*HP) f32
    wlin_p = jnp.zeros((HP, CP), jnp.float32).at[:H, :C].set(
        params["w_lin_t"]).astype(jnp.bfloat16)                     # (HP, CP) bf16
    blin_p = jnp.zeros((1, CP), jnp.float32).at[:, :C].set(params["b_lin"])

    padded = dict(fused=fused, whh=whh_p, wlin=wlin_p, blin=blin_p)
    dims = dict(V=V, E=E, H=H, C=C, HP=HP, CP=CP, VP=VP)
    return padded, dims


def make_model2_forward(padded, dims, batch, seq):
    """Returns a jitted forward(x_tokens, h0, c0) -> (seq*batch, num_classes)."""
    B, T = batch, seq
    H, HP, C, CP = dims["H"], dims["HP"], dims["C"], dims["CP"]
    TB = T * B

    kernel = functools.partial(_lstm_fused_kernel, T, B, HP)
    vmem = lambda: pl.BlockSpec(memory_space=pltpu.MemorySpace.VMEM)

    call = pl.pallas_call(
        kernel,
        out_shape=jax.ShapeDtypeStruct((TB, CP), jnp.float32),
        in_specs=[vmem() for _ in range(7)],
        out_specs=vmem(),
    )

    @jax.jit
    def forward(x_tokens, h0, c0):
        # torch's emb(x).view(T, B, E) is a raw reshape (NOT a transpose):
        # flat row r of that view is token x_tokens.reshape(-1)[r].
        tok2d = x_tokens.reshape(TB, 1).astype(jnp.int32)
        h0_p = jnp.zeros((B, HP), jnp.float32).at[:, :H].set(h0)
        c0_p = jnp.zeros((B, HP), jnp.float32).at[:, :H].set(c0)
        out = call(tok2d, padded["fused"], padded["whh"], padded["wlin"],
                   padded["blin"], h0_p, c0_p)
        # Column slice fused into the same jitted program (no extra dispatch).
        return out[:, :C]

    return forward


def model2_forward_ref(x_tokens, params, h0, c0):
    """Pure-JAX f32 reference (lax.scan LSTM) for correctness check."""
    emb = jnp.take(params["embedding"], x_tokens, axis=0)        # (B, T, E)
    B, T = x_tokens.shape
    E = params["embedding"].shape[1]
    H = params["w_hh_t"].shape[0]
    h_in = jnp.reshape(emb, (T, B, E)).astype(jnp.float32)       # torch .view

    def step(carry, x_t):
        h, c = carry
        gates = x_t @ params["w_ih_t"] + h @ params["w_hh_t"] + params["bias"]
        i = jax.nn.sigmoid(gates[:, 0 * H:1 * H])
        f = jax.nn.sigmoid(gates[:, 1 * H:2 * H])
        g = jnp.tanh(gates[:, 2 * H:3 * H])
        o = jax.nn.sigmoid(gates[:, 3 * H:4 * H])
        c = f * c + i * g
        h = o * jnp.tanh(c)
        return (h, c), h

    (_, _), hs = jax.lax.scan(step, (h0, c0), h_in)
    return hs.reshape(T * B, H) @ params["w_lin_t"] + params["b_lin"]


if __name__ == "__main__":
    # Small, deterministic setup
    VOCAB, EMB, HIDDEN, NUM_CLASSES = 50, 16, 32, 50
    BATCH, SEQ = 2, 8

    key = jax.random.PRNGKey(0)
    k_emb, k_wih, k_whh, k_bih, k_bhh, k_wl, k_bl, k_x, k_h0, k_c0 = \
        jax.random.split(key, 10)

    params = {
        "embedding": jax.random.normal(k_emb, (VOCAB, EMB), jnp.float32),
        # PyTorch stores weight_ih_l0 as (4H, E); we pass its transpose.
        "w_ih_t": (0.1 * jax.random.normal(k_wih, (4 * HIDDEN, EMB))).T.astype(jnp.float32),
        "w_hh_t": (0.1 * jax.random.normal(k_whh, (4 * HIDDEN, HIDDEN))).T.astype(jnp.float32),
        # b_ih + b_hh folded into one bias row.
        "bias": (0.1 * jax.random.normal(k_bih, (4 * HIDDEN,))
                 + 0.1 * jax.random.normal(k_bhh, (4 * HIDDEN,)))[None, :].astype(jnp.float32),
        "w_lin_t": (0.1 * jax.random.normal(k_wl, (NUM_CLASSES, HIDDEN))).T.astype(jnp.float32),
        "b_lin": (0.1 * jax.random.normal(k_bl, (NUM_CLASSES,)))[None, :].astype(jnp.float32),
    }

    x_tokens = jax.random.randint(k_x, (BATCH, SEQ), 0, VOCAB, dtype=jnp.int32)
    # torch draws h0/c0 with torch.randn each forward; passed explicitly here
    # as deterministic draws so the kernel can be checked against a reference.
    h0 = jax.random.normal(k_h0, (BATCH, HIDDEN), jnp.float32)
    c0 = jax.random.normal(k_c0, (BATCH, HIDDEN), jnp.float32)

    # One-time padding / fusion, then a single jitted forward per call.
    padded, dims = prepare_padded_params(params)
    forward = make_model2_forward(padded, dims, BATCH, SEQ)

    out = jax.block_until_ready(forward(x_tokens, h0, c0))
    ref = jax.block_until_ready(model2_forward_ref(x_tokens, params, h0, c0))

    assert out.shape == (SEQ * BATCH, NUM_CLASSES), out.shape
    # Non-recurrent matmuls use bf16 MXU operands (recurrence stays f32), so
    # the tolerance vs the pure-f32 reference is loosened accordingly.
    assert jnp.allclose(out, ref, atol=2e-2, rtol=2e-2), "mismatch vs reference"

    print("KERNEL_OK")
</pallas_src>

<mosaic_0001>
module attributes {stable_mosaic.version = 11 : i64} {
  func.func @_lstm_fused_kernel(%arg0: memref<16x1xi32, #tpu.memory_space<vmem>>, %arg1: memref<128x512xbf16, #tpu.memory_space<vmem>>, %arg2: memref<128x512xf32, #tpu.memory_space<vmem>>, %arg3: memref<128x128xbf16, #tpu.memory_space<vmem>>, %arg4: memref<1x128xf32, #tpu.memory_space<vmem>>, %arg5: memref<2x128xf32, #tpu.memory_space<vmem>>, %arg6: memref<2x128xf32, #tpu.memory_space<vmem>>, %arg7: memref<16x128xf32, #tpu.memory_space<vmem>>) attributes {dimension_semantics = [], scalar_prefetch = 0 : i64, scratch_operands = 0 : i64, tpu.core_type = #tpu.core_type<tc>} {
    %c0 = arith.constant 0 : index
    %c0_0 = arith.constant 0 : index
    %0 = vector.load %arg0[%c0, %c0_0] : memref<16x1xi32, #tpu.memory_space<vmem>>, vector<16x1xi32>
    %1 = tpu.iota {dimensions = array<i32: 1>} : vector<16x128xi32>
    %2 = vector.broadcast %0 : vector<16x1xi32> to vector<16x128xi32>
    %3 = arith.cmpi eq, %2, %1 : vector<16x128xi32>
    %4 = arith.extui %3 : vector<16x128xi1> to vector<16x128xi32>
    %5 = arith.sitofp %4 : vector<16x128xi32> to vector<16x128xf32>
    %6 = arith.truncf %5 : vector<16x128xf32> to vector<16x128xbf16>
    %c0_1 = arith.constant 0 : index
    %c0_2 = arith.constant 0 : index
    %7 = vector.load %arg1[%c0_1, %c0_2] : memref<128x512xbf16, #tpu.memory_space<vmem>>, vector<128x512xbf16>
    %cst = arith.constant dense<0.000000e+00> : vector<16x512xf32>
    %8 = tpu.matmul %6, %7, %cst {dimension_numbers = #tpu.dot_dimension_numbers<[1], [0], [0], [1], [0, 0, 1, 1], [], []>} : vector<16x128xbf16>, vector<128x512xbf16>, vector<16x512xf32> -> vector<16x512xf32>
    %c0_3 = arith.constant 0 : index
    %c0_4 = arith.constant 0 : index
    %9 = vector.load %arg5[%c0_3, %c0_4] : memref<2x128xf32, #tpu.memory_space<vmem>>, vector<2x128xf32>
    %c0_5 = arith.constant 0 : index
    %c0_6 = arith.constant 0 : index
    %10 = vector.load %arg6[%c0_5, %c0_6] : memref<2x128xf32, #tpu.memory_space<vmem>>, vector<2x128xf32>
    %11 = vector.extract_strided_slice %8 {offsets = [0, 0], sizes = [2, 512], strides = [1, 1]} : vector<16x512xf32> to vector<2x512xf32>
    %c0_7 = arith.constant 0 : index
    %c0_8 = arith.constant 0 : index
    %12 = vector.load %arg2[%c0_7, %c0_8] : memref<128x512xf32, #tpu.memory_space<vmem>>, vector<128x512xf32>
    %cst_9 = arith.constant dense<0.000000e+00> : vector<2x512xf32>
    %13 = tpu.matmul %9, %12, %cst_9 {dimension_numbers = #tpu.dot_dimension_numbers<[1], [0], [0], [1], [0, 0, 1, 1], [], []>} : vector<2x128xf32>, vector<128x512xf32>, vector<2x512xf32> -> vector<2x512xf32>
    %14 = arith.addf %11, %13 : vector<2x512xf32>
    %15 = vector.extract_strided_slice %14 {offsets = [0, 0], sizes = [2, 128], strides = [1, 1]} : vector<2x512xf32> to vector<2x128xf32>
    %16 = arith.negf %15 : vector<2x128xf32>
    %17 = math.exp %16 : vector<2x128xf32>
    %cst_10 = arith.constant 1.000000e+00 : f32
    %18 = vector.broadcast %cst_10 : f32 to vector<2x128xf32>
    %19 = arith.addf %18, %17 : vector<2x128xf32>
    %20 = arith.divf %18, %19 : vector<2x128xf32>
    %21 = vector.extract_strided_slice %14 {offsets = [0, 128], sizes = [2, 128], strides = [1, 1]} : vector<2x512xf32> to vector<2x128xf32>
    %22 = arith.negf %21 : vector<2x128xf32>
    %23 = math.exp %22 : vector<2x128xf32>
    %cst_11 = arith.constant 1.000000e+00 : f32
    %24 = vector.broadcast %cst_11 : f32 to vector<2x128xf32>
    %25 = arith.addf %24, %23 : vector<2x128xf32>
    %26 = arith.divf %24, %25 : vector<2x128xf32>
    %27 = vector.extract_strided_slice %14 {offsets = [0, 256], sizes = [2, 128], strides = [1, 1]} : vector<2x512xf32> to vector<2x128xf32>
    %28 = math.tanh %27 : vector<2x128xf32>
    %29 = vector.extract_strided_slice %14 {offsets = [0, 384], sizes = [2, 128], strides = [1, 1]} : vector<2x512xf32> to vector<2x128xf32>
    %30 = arith.negf %29 : vector<2x128xf32>
    %31 = math.exp %30 : vector<2x128xf32>
    %cst_12 = arith.constant 1.000000e+00 : f32
    %32 = vector.broadcast %cst_12 : f32 to vector<2x128xf32>
    %33 = arith.addf %32, %31 : vector<2x128xf32>
    %34 = arith.divf %32, %33 : vector<2x128xf32>
    %35 = arith.mulf %26, %10 : vector<2x128xf32>
    %36 = arith.mulf %20, %28 : vector<2x128xf32>
    %37 = arith.addf %35, %36 : vector<2x128xf32>
    %38 = math.tanh %37 : vector<2x128xf32>
    %39 = arith.mulf %34, %38 : vector<2x128xf32>
    %40 = vector.extract_strided_slice %8 {offsets = [2, 0], sizes = [2, 512], strides = [1, 1]} : vector<16x512xf32> to vector<2x512xf32>
    %c0_13 = arith.constant 0 : index
    %c0_14 = arith.constant 0 : index
    %41 = vector.load %arg2[%c0_13, %c0_14] : memref<128x512xf32, #tpu.memory_space<vmem>>, vector<128x512xf32>
    %cst_15 = arith.constant dense<0.000000e+00> : vector<2x512xf32>
    %42 = tpu.matmul %39, %41, %cst_15 {dimension_numbers = #tpu.dot_dimension_numbers<[1], [0], [0], [1], [0, 0, 1, 1], [], []>} : vector<2x128xf32>, vector<128x512xf32>, vector<2x512xf32> -> vector<2x512xf32>
    %43 = arith.addf %40, %42 : vector<2x512xf32>
    %44 = vector.extract_strided_slice %43 {offsets = [0, 0], sizes = [2, 128], strides = [1, 1]} : vector<2x512xf32> to vector<2x128xf32>
    %45 = arith.negf %44 : vector<2x128xf32>
    %46 = math.exp %45 : vector<2x128xf32>
    %cst_16 = arith.constant 1.000000e+00 : f32
    %47 = vector.broadcast %cst_16 : f32 to vector<2x128xf32>
    %48 = arith.addf %47, %46 : vector<2x128xf32>
    %49 = arith.divf %47, %48 : vector<2x128xf32>
    %50 = vector.extract_strided_slice %43 {offsets = [0, 128], sizes = [2, 128], strides = [1, 1]} : vector<2x512xf32> to vector<2x128xf32>
    %51 = arith.negf %50 : vector<2x128xf32>
    %52 = math.exp %51 : vector<2x128xf32>
    %cst_17 = arith.constant 1.000000e+00 : f32
    %53 = vector.broadcast %cst_17 : f32 to vector<2x128xf32>
    %54 = arith.addf %53, %52 : vector<2x128xf32>
    %55 = arith.divf %53, %54 : vector<2x128xf32>
    %56 = vector.extract_strided_slice %43 {offsets = [0, 256], sizes = [2, 128], strides = [1, 1]} : vector<2x512xf32> to vector<2x128xf32>
    %57 = math.tanh %56 : vector<2x128xf32>
    %58 = vector.extract_strided_slice %43 {offsets = [0, 384], sizes = [2, 128], strides = [1, 1]} : vector<2x512xf32> to vector<2x128xf32>
    %59 = arith.negf %58 : vector<2x128xf32>
    %60 = math.exp %59 : vector<2x128xf32>
    %cst_18 = arith.constant 1.000000e+00 : f32
    %61 = vector.broadcast %cst_18 : f32 to vector<2x128xf32>
    %62 = arith.addf %61, %60 : vector<2x128xf32>
    %63 = arith.divf %61, %62 : vector<2x128xf32>
    %64 = arith.mulf %55, %37 : vector<2x128xf32>
    %65 = arith.mulf %49, %57 : vector<2x128xf32>
    %66 = arith.addf %64, %65 : vector<2x128xf32>
    %67 = math.tanh %66 : vector<2x128xf32>
    %68 = arith.mulf %63, %67 : vector<2x128xf32>
    %69 = vector.extract_strided_slice %8 {offsets = [4, 0], sizes = [2, 512], strides = [1, 1]} : vector<16x512xf32> to vector<2x512xf32>
    %c0_19 = arith.constant 0 : index
    %c0_20 = arith.constant 0 : index
    %70 = vector.load %arg2[%c0_19, %c0_20] : memref<128x512xf32, #tpu.memory_space<vmem>>, vector<128x512xf32>
    %cst_21 = arith.constant dense<0.000000e+00> : vector<2x512xf32>
    %71 = tpu.matmul %68, %70, %cst_21 {dimension_numbers = #tpu.dot_dimension_numbers<[1], [0], [0], [1], [0, 0, 1, 1], [], []>} : vector<2x128xf32>, vector<128x512xf32>, vector<2x512xf32> -> vector<2x512xf32>
    %72 = arith.addf %69, %71 : vector<2x512xf32>
    %73 = vector.extract_strided_slice %72 {offsets = [0, 0], sizes = [2, 128], strides = [1, 1]} : vector<2x512xf32> to vector<2x128xf32>
    %74 = arith.negf %73 : vector<2x128xf32>
    %75 = math.exp %74 : vector<2x128xf32>
    %cst_22 = arith.constant 1.000000e+00 : f32
    %76 = vector.broadcast %cst_22 : f32 to vector<2x128xf32>
    %77 = arith.addf %76, %75 : vector<2x128xf32>
    %78 = arith.divf %76, %77 : vector<2x128xf32>
    %79 = vector.extract_strided_slice %72 {offsets = [0, 128], sizes = [2, 128], strides = [1, 1]} : vector<2x512xf32> to vector<2x128xf32>
    %80 = arith.negf %79 : vector<2x128xf32>
    %81 = math.exp %80 : vector<2x128xf32>
    %cst_23 = arith.constant 1.000000e+00 : f32
    %82 = vector.broadcast %cst_23 : f32 to vector<2x128xf32>
    %83 = arith.addf %82, %81 : vector<2x128xf32>
    %84 = arith.divf %82, %83 : vector<2x128xf32>
    %85 = vector.extract_strided_slice %72 {offsets = [0, 256], sizes = [2, 128], strides = [1, 1]} : vector<2x512xf32> to vector<2x128xf32>
    %86 = math.tanh %85 : vector<2x128xf32>
    %87 = vector.extract_strided_slice %72 {offsets = [0, 384], sizes = [2, 128], strides = [1, 1]} : vector<2x512xf32> to vector<2x128xf32>
    %88 = arith.negf %87 : vector<2x128xf32>
    %89 = math.exp %88 : vector<2x128xf32>
    %cst_24 = arith.constant 1.000000e+00 : f32
    %90 = vector.broadcast %cst_24 : f32 to vector<2x128xf32>
    %91 = arith.addf %90, %89 : vector<2x128xf32>
    %92 = arith.divf %90, %91 : vector<2x128xf32>
    %93 = arith.mulf %84, %66 : vector<2x128xf32>
    %94 = arith.mulf %78, %86 : vector<2x128xf32>
    %95 = arith.addf %93, %94 : vector<2x128xf32>
    %96 = math.tanh %95 : vector<2x128xf32>
    %97 = arith.mulf %92, %96 : vector<2x128xf32>
    %98 = vector.extract_strided_slice %8 {offsets = [6, 0], sizes = [2, 512], strides = [1, 1]} : vector<16x512xf32> to vector<2x512xf32>
    %c0_25 = arith.constant 0 : index
    %c0_26 = arith.constant 0 : index
    %99 = vector.load %arg2[%c0_25, %c0_26] : memref<128x512xf32, #tpu.memory_space<vmem>>, vector<128x512xf32>
    %cst_27 = arith.constant dense<0.000000e+00> : vector<2x512xf32>
    %100 = tpu.matmul %97, %99, %cst_27 {dimension_numbers = #tpu.dot_dimension_numbers<[1], [0], [0], [1], [0, 0, 1, 1], [], []>} : vector<2x128xf32>, vector<128x512xf32>, vector<2x512xf32> -> vector<2x512xf32>
    %101 = arith.addf %98, %100 : vector<2x512xf32>
    %102 = vector.extract_strided_slice %101 {offsets = [0, 0], sizes = [2, 128], strides = [1, 1]} : vector<2x512xf32> to vector<2x128xf32>
    %103 = arith.negf %102 : vector<2x128xf32>
    %104 = math.exp %103 : vector<2x128xf32>
    %cst_28 = arith.constant 1.000000e+00 : f32
    %105 = vector.broadcast %cst_28 : f32 to vector<2x128xf32>
    %106 = arith.addf %105, %104 : vector<2x128xf32>
    %107 = arith.divf %105, %106 : vector<2x128xf32>
    %108 = vector.extract_strided_slice %101 {offsets = [0, 128], sizes = [2, 128], strides = [1, 1]} : vector<2x512xf32> to vector<2x128xf32>
    %109 = arith.negf %108 : vector<2x128xf32>
    %110 = math.exp %109 : vector<2x128xf32>
    %cst_29 = arith.constant 1.000000e+00 : f32
    %111 = vector.broadcast %cst_29 : f32 to vector<2x128xf32>
    %112 = arith.addf %111, %110 : vector<2x128xf32>
    %113 = arith.divf %111, %112 : vector<2x128xf32>
    %114 = vector.extract_strided_slice %101 {offsets = [0, 256], sizes = [2, 128], strides = [1, 1]} : vector<2x512xf32> to vector<2x128xf32>
    %115 = math.tanh %114 : vector<2x128xf32>
    %116 = vector.extract_strided_slice %101 {offsets = [0, 384], sizes = [2, 128], strides = [1, 1]} : vector<2x512xf32> to vector<2x128xf32>
    %117 = arith.negf %116 : vector<2x128xf32>
    %118 = math.exp %117 : vector<2x128xf32>
    %cst_30 = arith.constant 1.000000e+00 : f32
    %119 = vector.broadcast %cst_30 : f32 to vector<2x128xf32>
    %120 = arith.addf %119, %118 : vector<2x128xf32>
    %121 = arith.divf %119, %120 : vector<2x128xf32>
    %122 = arith.mulf %113, %95 : vector<2x128xf32>
    %123 = arith.mulf %107, %115 : vector<2x128xf32>
    %124 = arith.addf %122, %123 : vector<2x128xf32>
    %125 = math.tanh %124 : vector<2x128xf32>
    %126 = arith.mulf %121, %125 : vector<2x128xf32>
    %127 = vector.extract_strided_slice %8 {offsets = [8, 0], sizes = [2, 512], strides = [1, 1]} : vector<16x512xf32> to vector<2x512xf32>
    %c0_31 = arith.constant 0 : index
    %c0_32 = arith.constant 0 : index
    %128 = vector.load %arg2[%c0_31, %c0_32] : memref<128x512xf32, #tpu.memory_space<vmem>>, vector<128x512xf32>
    %cst_33 = arith.constant dense<0.000000e+00> : vector<2x512xf32>
    %129 = tpu.matmul %126, %128, %cst_33 {dimension_numbers = #tpu.dot_dimension_numbers<[1], [0], [0], [1], [0, 0, 1, 1], [], []>} : vector<2x128xf32>, vector<128x512xf32>, vector<2x512xf32> -> vector<2x512xf32>
    %130 = arith.addf %127, %129 : vector<2x512xf32>
    %131 = vector.extract_strided_slice %130 {offsets = [0, 0], sizes = [2, 128], strides = [1, 1]} : vector<2x512xf32> to vector<2x128xf32>
    %132 = arith.negf %131 : vector<2x128xf32>
    %133 = math.exp %132 : vector<2x128xf32>
    %cst_34 = arith.constant 1.000000e+00 : f32
    %134 = vector.broadcast %cst_34 : f32 to vector<2x128xf32>
    %135 = arith.addf %134, %133 : vector<2x128xf32>
    %136 = arith.divf %134, %135 : vector<2x128xf32>
    %137 = vector.extract_strided_slice %130 {offsets = [0, 128], sizes = [2, 128], strides = [1, 1]} : vector<2x512xf32> to vector<2x128xf32>
    %138 = arith.negf %137 : vector<2x128xf32>
    %139 = math.exp %138 : vector<2x128xf32>
    %cst_35 = arith.constant 1.000000e+00 : f32
    %140 = vector.broadcast %cst_35 : f32 to vector<2x128xf32>
    %141 = arith.addf %140, %139 : vector<2x128xf32>
    %142 = arith.divf %140, %141 : vector<2x128xf32>
    %143 = vector.extract_strided_slice %130 {offsets = [0, 256], sizes = [2, 128], strides = [1, 1]} : vector<2x512xf32> to vector<2x128xf32>
    %144 = math.tanh %143 : vector<2x128xf32>
    %145 = vector.extract_strided_slice %130 {offsets = [0, 384], sizes = [2, 128], strides = [1, 1]} : vector<2x512xf32> to vector<2x128xf32>
    %146 = arith.negf %145 : vector<2x128xf32>
    %147 = math.exp %146 : vector<2x128xf32>
    %cst_36 = arith.constant 1.000000e+00 : f32
    %148 = vector.broadcast %cst_36 : f32 to vector<2x128xf32>
    %149 = arith.addf %148, %147 : vector<2x128xf32>
    %150 = arith.divf %148, %149 : vector<2x128xf32>
    %151 = arith.mulf %142, %124 : vector<2x128xf32>
    %152 = arith.mulf %136, %144 : vector<2x128xf32>
    %153 = arith.addf %151, %152 : vector<2x128xf32>
    %154 = math.tanh %153 : vector<2x128xf32>
    %155 = arith.mulf %150, %154 : vector<2x128xf32>
    %156 = vector.extract_strided_slice %8 {offsets = [10, 0], sizes = [2, 512], strides = [1, 1]} : vector<16x512xf32> to vector<2x512xf32>
    %c0_37 = arith.constant 0 : index
    %c0_38 = arith.constant 0 : index
    %157 = vector.load %arg2[%c0_37, %c0_38] : memref<128x512xf32, #tpu.memory_space<vmem>>, vector<128x512xf32>
    %cst_39 = arith.constant dense<0.000000e+00> : vector<2x512xf32>
    %158 = tpu.matmul %155, %157, %cst_39 {dimension_numbers = #tpu.dot_dimension_numbers<[1], [0], [0], [1], [0, 0, 1, 1], [], []>} : vector<2x128xf32>, vector<128x512xf32>, vector<2x512xf32> -> vector<2x512xf32>
    %159 = arith.addf %156, %158 : vector<2x512xf32>
    %160 = vector.extract_strided_slice %159 {offsets = [0, 0], sizes = [2, 128], strides = [1, 1]} : vector<2x512xf32> to vector<2x128xf32>
    %161 = arith.negf %160 : vector<2x128xf32>
    %162 = math.exp %161 : vector<2x128xf32>
    %cst_40 = arith.constant 1.000000e+00 : f32
    %163 = vector.broadcast %cst_40 : f32 to vector<2x128xf32>
    %164 = arith.addf %163, %162 : vector<2x128xf32>
    %165 = arith.divf %163, %164 : vector<2x128xf32>
    %166 = vector.extract_strided_slice %159 {offsets = [0, 128], sizes = [2, 128], strides = [1, 1]} : vector<2x512xf32> to vector<2x128xf32>
    %167 = arith.negf %166 : vector<2x128xf32>
    %168 = math.exp %167 : vector<2x128xf32>
    %cst_41 = arith.constant 1.000000e+00 : f32
    %169 = vector.broadcast %cst_41 : f32 to vector<2x128xf32>
    %170 = arith.addf %169, %168 : vector<2x128xf32>
    %171 = arith.divf %169, %170 : vector<2x128xf32>
    %172 = vector.extract_strided_slice %159 {offsets = [0, 256], sizes = [2, 128], strides = [1, 1]} : vector<2x512xf32> to vector<2x128xf32>
    %173 = math.tanh %172 : vector<2x128xf32>
    %174 = vector.extract_strided_slice %159 {offsets = [0, 384], sizes = [2, 128], strides = [1, 1]} : vector<2x512xf32> to vector<2x128xf32>
    %175 = arith.negf %174 : vector<2x128xf32>
    %176 = math.exp %175 : vector<2x128xf32>
    %cst_42 = arith.constant 1.000000e+00 : f32
    %177 = vector.broadcast %cst_42 : f32 to vector<2x128xf32>
    %178 = arith.addf %177, %176 : vector<2x128xf32>
    %179 = arith.divf %177, %178 : vector<2x128xf32>
    %180 = arith.mulf %171, %153 : vector<2x128xf32>
    %181 = arith.mulf %165, %173 : vector<2x128xf32>
    %182 = arith.addf %180, %181 : vector<2x128xf32>
    %183 = math.tanh %182 : vector<2x128xf32>
    %184 = arith.mulf %179, %183 : vector<2x128xf32>
    %185 = vector.extract_strided_slice %8 {offsets = [12, 0], sizes = [2, 512], strides = [1, 1]} : vector<16x512xf32> to vector<2x512xf32>
    %c0_43 = arith.constant 0 : index
    %c0_44 = arith.constant 0 : index
    %186 = vector.load %arg2[%c0_43, %c0_44] : memref<128x512xf32, #tpu.memory_space<vmem>>, vector<128x512xf32>
    %cst_45 = arith.constant dense<0.000000e+00> : vector<2x512xf32>
    %187 = tpu.matmul %184, %186, %cst_45 {dimension_numbers = #tpu.dot_dimension_numbers<[1], [0], [0], [1], [0, 0, 1, 1], [], []>} : vector<2x128xf32>, vector<128x512xf32>, vector<2x512xf32> -> vector<2x512xf32>
    %188 = arith.addf %185, %187 : vector<2x512xf32>
    %189 = vector.extract_strided_slice %188 {offsets = [0, 0], sizes = [2, 128], strides = [1, 1]} : vector<2x512xf32> to vector<2x128xf32>
    %190 = arith.negf %189 : vector<2x128xf32>
    %191 = math.exp %190 : vector<2x128xf32>
    %cst_46 = arith.constant 1.000000e+00 : f32
    %192 = vector.broadcast %cst_46 : f32 to vector<2x128xf32>
    %193 = arith.addf %192, %191 : vector<2x128xf32>
    %194 = arith.divf %192, %193 : vector<2x128xf32>
    %195 = vector.extract_strided_slice %188 {offsets = [0, 128], sizes = [2, 128], strides = [1, 1]} : vector<2x512xf32> to vector<2x128xf32>
    %196 = arith.negf %195 : vector<2x128xf32>
    %197 = math.exp %196 : vector<2x128xf32>
    %cst_47 = arith.constant 1.000000e+00 : f32
    %198 = vector.broadcast %cst_47 : f32 to vector<2x128xf32>
    %199 = arith.addf %198, %197 : vector<2x128xf32>
    %200 = arith.divf %198, %199 : vector<2x128xf32>
    %201 = vector.extract_strided_slice %188 {offsets = [0, 256], sizes = [2, 128], strides = [1, 1]} : vector<2x512xf32> to vector<2x128xf32>
    %202 = math.tanh %201 : vector<2x128xf32>
    %203 = vector.extract_strided_slice %188 {offsets = [0, 384], sizes = [2, 128], strides = [1, 1]} : vector<2x512xf32> to vector<2x128xf32>
    %204 = arith.negf %203 : vector<2x128xf32>
    %205 = math.exp %204 : vector<2x128xf32>
    %cst_48 = arith.constant 1.000000e+00 : f32
    %206 = vector.broadcast %cst_48 : f32 to vector<2x128xf32>
    %207 = arith.addf %206, %205 : vector<2x128xf32>
    %208 = arith.divf %206, %207 : vector<2x128xf32>
    %209 = arith.mulf %200, %182 : vector<2x128xf32>
    %210 = arith.mulf %194, %202 : vector<2x128xf32>
    %211 = arith.addf %209, %210 : vector<2x128xf32>
    %212 = math.tanh %211 : vector<2x128xf32>
    %213 = arith.mulf %208, %212 : vector<2x128xf32>
    %214 = vector.extract_strided_slice %8 {offsets = [14, 0], sizes = [2, 512], strides = [1, 1]} : vector<16x512xf32> to vector<2x512xf32>
    %c0_49 = arith.constant 0 : index
    %c0_50 = arith.constant 0 : index
    %215 = vector.load %arg2[%c0_49, %c0_50] : memref<128x512xf32, #tpu.memory_space<vmem>>, vector<128x512xf32>
    %cst_51 = arith.constant dense<0.000000e+00> : vector<2x512xf32>
    %216 = tpu.matmul %213, %215, %cst_51 {dimension_numbers = #tpu.dot_dimension_numbers<[1], [0], [0], [1], [0, 0, 1, 1], [], []>} : vector<2x128xf32>, vector<128x512xf32>, vector<2x512xf32> -> vector<2x512xf32>
    %217 = arith.addf %214, %216 : vector<2x512xf32>
    %218 = vector.extract_strided_slice %217 {offsets = [0, 0], sizes = [2, 128], strides = [1, 1]} : vector<2x512xf32> to vector<2x128xf32>
    %219 = arith.negf %218 : vector<2x128xf32>
    %220 = math.exp %219 : vector<2x128xf32>
    %cst_52 = arith.constant 1.000000e+00 : f32
    %221 = vector.broadcast %cst_52 : f32 to vector<2x128xf32>
    %222 = arith.addf %221, %220 : vector<2x128xf32>
    %223 = arith.divf %221, %222 : vector<2x128xf32>
    %224 = vector.extract_strided_slice %217 {offsets = [0, 128], sizes = [2, 128], strides = [1, 1]} : vector<2x512xf32> to vector<2x128xf32>
    %225 = arith.negf %224 : vector<2x128xf32>
    %226 = math.exp %225 : vector<2x128xf32>
    %cst_53 = arith.constant 1.000000e+00 : f32
    %227 = vector.broadcast %cst_53 : f32 to vector<2x128xf32>
    %228 = arith.addf %227, %226 : vector<2x128xf32>
    %229 = arith.divf %227, %228 : vector<2x128xf32>
    %230 = vector.extract_strided_slice %217 {offsets = [0, 256], sizes = [2, 128], strides = [1, 1]} : vector<2x512xf32> to vector<2x128xf32>
    %231 = math.tanh %230 : vector<2x128xf32>
    %232 = vector.extract_strided_slice %217 {offsets = [0, 384], sizes = [2, 128], strides = [1, 1]} : vector<2x512xf32> to vector<2x128xf32>
    %233 = arith.negf %232 : vector<2x128xf32>
    %234 = math.exp %233 : vector<2x128xf32>
    %cst_54 = arith.constant 1.000000e+00 : f32
    %235 = vector.broadcast %cst_54 : f32 to vector<2x128xf32>
    %236 = arith.addf %235, %234 : vector<2x128xf32>
    %237 = arith.divf %235, %236 : vector<2x128xf32>
    %238 = arith.mulf %229, %211 : vector<2x128xf32>
    %239 = arith.mulf %223, %231 : vector<2x128xf32>
    %240 = arith.addf %238, %239 : vector<2x128xf32>
    %241 = math.tanh %240 : vector<2x128xf32>
    %242 = arith.mulf %237, %241 : vector<2x128xf32>
    %243 = tpu.concatenate %39, %68, %97, %126, %155, %184, %213, %242 in 0 : vector<2x128xf32>, vector<2x128xf32>, vector<2x128xf32>, vector<2x128xf32>, vector<2x128xf32>, vector<2x128xf32>, vector<2x128xf32>, vector<2x128xf32> -> vector<16x128xf32>
    %244 = arith.truncf %243 : vector<16x128xf32> to vector<16x128xbf16>
    %c0_55 = arith.constant 0 : index
    %c0_56 = arith.constant 0 : index
    %245 = vector.load %arg3[%c0_55, %c0_56] : memref<128x128xbf16, #tpu.memory_space<vmem>>, vector<128x128xbf16>
    %cst_57 = arith.constant dense<0.000000e+00> : vector<16x128xf32>
    %246 = tpu.matmul %244, %245, %cst_57 {dimension_numbers = #tpu.dot_dimension_numbers<[1], [0], [0], [1], [0, 0, 1, 1], [], []>} : vector<16x128xbf16>, vector<128x128xbf16>, vector<16x128xf32> -> vector<16x128xf32>
    %c0_58 = arith.constant 0 : index
    %c0_59 = arith.constant 0 : index
    %247 = vector.load %arg4[%c0_58, %c0_59] : memref<1x128xf32, #tpu.memory_space<vmem>>, vector<1x128xf32>
    %248 = vector.broadcast %247 : vector<1x128xf32> to vector<16x128xf32>
    %249 = arith.addf %246, %248 : vector<16x128xf32>
    %c0_60 = arith.constant 0 : index
    %c0_61 = arith.constant 0 : index
    %250 = vector.load %arg7[%c0_60, %c0_61] : memref<16x128xf32, #tpu.memory_space<vmem>>, vector<16x128xf32>
    tpu.vector_store %arg7[%c0_60, %c0_61], %249 {strides = array<i32>} : memref<16x128xf32, #tpu.memory_space<vmem>>, vector<16x128xf32>,
    return
  }
}

</mosaic_0001>

<llo_original>
// kernel: forward.1
$region0: #{forward.1}
  #allocation0 [shape = 'u32[]', space=smem, size = 0x4, offset = 0x4, fixed_abs, tag = 'smem constant byte address 0x4 - core index']
  #allocation1 [shape = 'u32[144,128]{1,0:T(1,128)}', space=vmem, size = 0x12000, scoped, tag = 'internal scratch']
  %s0 = inlined_call_operand.vmem [shape: s32[16,1], index: 0, kind: input, shape index: {}]
  %s1 = inlined_call_operand.hbm [shape: bf16[128,512], index: 1, kind: input, shape index: {}]
  %s2 = inlined_call_operand.hbm [shape: f32[128,512], index: 2, kind: input, shape index: {}]
  %s3 = inlined_call_operand.hbm [shape: bf16[128,128], index: 3, kind: input, shape index: {}]
  %s4 = inlined_call_operand.vmem [shape: f32[1,128], index: 4, kind: input, shape index: {}]
  %s5 = inlined_call_operand.vmem [shape: f32[2,128], index: 5, kind: input, shape index: {}]
  %s6 = inlined_call_operand.vmem [shape: f32[2,128], index: 6, kind: input, shape index: {}]
  %s7 = inlined_call_operand.hbm [shape: f32[16,128], index: 7, kind: output, shape index: {}]
  %s8 = sld [smem:[#allocation0]]
  $region50: #{forward.1} parent=0
    _
  %s10 = ssub.s32 1, %s8
  %s11 = scalar_select 0, %s10, %s8
  $region1: #{forward.1} parent=0
    #allocation2 [shape = 'u8[131072]{0}', space=vmem, size = 0x20000, scoped, tag = 'input window, operand 1, single buffered']
    #allocation3 [shape = 's32[1]{0}', space=sflag, size = 0x4, scoped, tag = 'scoped memory for forward.1']
    #allocation4 [shape = 's32[1]{0}', space=sflag, size = 0x4, scoped, tag = 'scoped memory for forward.1']
    #allocation5 [shape = 'u8[262144]{0}', space=vmem, size = 0x40000, scoped, tag = 'input window, operand 2, single buffered']
    #allocation6 [shape = 's32[1]{0}', space=sflag, size = 0x4, scoped, tag = 'scoped memory for forward.1']
    #allocation7 [shape = 'u8[32768]{0}', space=vmem, size = 0x8000, scoped, tag = 'input window, operand 3, single buffered']
    #allocation8 [shape = 'u8[8192]{0}', space=vmem, size = 0x2000, scoped, tag = 'output window, operand 0, single buffered']
    %12 = vsyncpa [#allocation3], 0
    %13 = vsyncpa [#allocation6], 0
    %14 = vsyncpa [#allocation4], 0
    // Predicated region
    $region2: #{forward.1} parent=1 // pred_check
      _
    $region3: #{forward.1} parent=1 // pred_check_branch
      %16 = sbr.rel (0) target = $region5
    $region4: #{forward.1} parent=1 // pred_region
      _
    $region5: #{forward.1} parent=1 // pred_fallthru
      _
    // Predicated region
    $region6: #{forward.1} parent=1 // pred_check
      _
    $region7: #{forward.1} parent=1 // pred_check_branch
      %18 = sbr.rel (0) target = $region9
    $region8: #{forward.1} parent=1 // pred_region
      %s20 = ssub.s32 4096, 4096
      %21 = vsyncadd [#allocation3], %s20
      %s22 = sshll.u32 [#allocation2], 4
      %s23 = int_to_ptr.vmem [resolvable:$true] %s22
      %28 = dma.hbm_to_vmem [thread:$0]  %s1, 4096, %s23, [#allocation3], 256, 256, 16
    $region9: #{forward.1} parent=1 // pred_fallthru
      _
    // Predicated region
    $region10: #{forward.1} parent=1 // pred_check
      _
    $region11: #{forward.1} parent=1 // pred_check_branch
      %30 = sbr.rel (0) target = $region13
    $region12: #{forward.1} parent=1 // pred_region
      %s32 = ssub.s32 8192, 8192
      %33 = vsyncadd [#allocation6], %s32
      %s34 = sshll.u32 [#allocation5], 4
      %s35 = int_to_ptr.vmem [resolvable:$true] %s34
      %40 = dma.hbm_to_vmem [thread:$0]  %s2, 8192, %s35, [#allocation6], 512, 512, 32
    $region13: #{forward.1} parent=1 // pred_fallthru
      _
    // Predicated region
    $region14: #{forward.1} parent=1 // pred_check
      _
    $region15: #{forward.1} parent=1 // pred_check_branch
      %42 = sbr.rel (0) target = $region17
    $region16: #{forward.1} parent=1 // pred_region
      %s44 = ssub.s32 1024, 1024
      %45 = vsyncadd [#allocation6], %s44
      %s46 = sshll.u32 [#allocation7], 4
      %s47 = int_to_ptr.vmem [resolvable:$true] %s46
      %52 = dma.hbm_to_vmem [thread:$0]  %s3, 1024, %s47, [#allocation6], 64, 64, 4
    $region17: #{forward.1} parent=1 // pred_fallthru
      _
    // Predicated region
    $region18: #{forward.1} parent=1 // pred_check
      _
    $region19: #{forward.1} parent=1 // pred_check_branch
      %54 = sbr.rel (0) target = $region21
    $region20: #{forward.1} parent=1 // pred_region
      _
    $region21: #{forward.1} parent=1 // pred_fallthru
      _
    // Predicated region
    $region22: #{forward.1} parent=1 // pred_check
      _
    $region23: #{forward.1} parent=1 // pred_check_branch
      %56 = sbr.rel (0) target = $region25
    $region24: #{forward.1} parent=1 // pred_region
      _
    $region25: #{forward.1} parent=1 // pred_fallthru
      _
    // Predicated region
    $region26: #{forward.1} parent=1 // pred_check
      _
    $region27: #{forward.1} parent=1 // pred_check_branch
      %58 = sbr.rel (0) target = $region29
    $region28: #{forward.1} parent=1 // pred_region
      _
    $region29: #{forward.1} parent=1 // pred_fallthru
      _
    // Predicated region
    $region30: #{forward.1} parent=1 // pred_check
      _
    $region31: #{forward.1} parent=1 // pred_check_branch
      %60 = sbr.rel (0) target = $region33
    $region32: #{forward.1} parent=1 // pred_region
      %61 = dma.done [#allocation3], 4096
    $region33: #{forward.1} parent=1 // pred_fallthru
      _
    // Predicated region
    $region34: #{forward.1} parent=1 // pred_check
      _
    $region35: #{forward.1} parent=1 // pred_check_branch
      %63 = sbr.rel (0) target = $region37
    $region36: #{forward.1} parent=1 // pred_region
      %64 = dma.done [#allocation6], 8192
    $region37: #{forward.1} parent=1 // pred_fallthru
      _
    // Predicated region
    $region38: #{forward.1} parent=1 // pred_check
      _
    $region39: #{forward.1} parent=1 // pred_check_branch
      %66 = sbr.rel (0) target = $region41
    $region40: #{forward.1} parent=1 // pred_region
      %67 = dma.done [#allocation6], 1024
    $region41: #{forward.1} parent=1 // pred_fallthru
      _
    %v69 = vld [vmem:[%s0] sm:$0xff]
    %v70 = vld [vmem:[%s0 + $0x8] sm:$0xff]
    %v71 = vlaneseq
    %v72 = vand.u32 %v71, 127
    %73 = vset.pattern.permute.xlu0 0
    %74 = vperm.xlu0 %73, %v69
    %v75 = vpop.permute.xlu0 %74
    %76 = vset.pattern.permute.xlu0 0
    %77 = vperm.xlu0 %76, %v70
    %v78 = vpop.permute.xlu0 %77
    %vm79 = vcmp.eq.s32.totalorder %v75, %v72
    %vm80 = vcmp.eq.s32.totalorder %v78, %v72
    %v81 = vsel %vm79, 1, 0
    %v82 = vsel %vm80, 1, 0
    %v83 = vcvt.s32.f32 %v81
    %v84 = vcvt.s32.f32 %v82
    %v85 = vpack.c.bf16 %v84, %v83
    %v86 = vld [vmem:[#allocation2] sm:$0xff]
    %v87 = vld [vmem:[#allocation2 + $0x8] sm:$0xff]
    %v88 = vld [vmem:[#allocation2 + $0x10] sm:$0xff]
    %v89 = vld [vmem:[#allocation2 + $0x18] sm:$0xff]
    %v90 = vld [vmem:[#allocation2 + $0x20] sm:$0xff]
    %v91 = vld [vmem:[#allocation2 + $0x28] sm:$0xff]
    %v92 = vld [vmem:[#allocation2 + $0x30] sm:$0xff]
    %v93 = vld [vmem:[#allocation2 + $0x38] sm:$0xff]
    %v94 = vld [vmem:[#allocation2 + $0x40] sm:$0xff]
    %v95 = vld [vmem:[#allocation2 + $0x48] sm:$0xff]
    %v96 = vld [vmem:[#allocation2 + $0x50] sm:$0xff]
    %v97 = vld [vmem:[#allocation2 + $0x58] sm:$0xff]
    %v98 = vld [vmem:[#allocation2 + $0x60] sm:$0xff]
    %v99 = vld [vmem:[#allocation2 + $0x68] sm:$0xff]
    %v100 = vld [vmem:[#allocation2 + $0x70] sm:$0xff]
    %v101 = vld [vmem:[#allocation2 + $0x78] sm:$0xff]
    %v102 = vld [vmem:[#allocation2 + $0x80] sm:$0xff]
    %v103 = vld [vmem:[#allocation2 + $0x88] sm:$0xff]
    %v104 = vld [vmem:[#allocation2 + $0x90] sm:$0xff]
    %v105 = vld [vmem:[#allocation2 + $0x98] sm:$0xff]
    %v106 = vld [vmem:[#allocation2 + $0xa0] sm:$0xff]
    %v107 = vld [vmem:[#allocation2 + $0xa8] sm:$0xff]
    %v108 = vld [vmem:[#allocation2 + $0xb0] sm:$0xff]
    %v109 = vld [vmem:[#allocation2 + $0xb8] sm:$0xff]
    %v110 = vld [vmem:[#allocation2 + $0xc0] sm:$0xff]
    %v111 = vld [vmem:[#allocation2 + $0xc8] sm:$0xff]
    %v112 = vld [vmem:[#allocation2 + $0xd0] sm:$0xff]
    %v113 = vld [vmem:[#allocation2 + $0xd8] sm:$0xff]
    %v114 = vld [vmem:[#allocation2 + $0xe0] sm:$0xff]
    %v115 = vld [vmem:[#allocation2 + $0xe8] sm:$0xff]
    %v116 = vld [vmem:[#allocation2 + $0xf0] sm:$0xff]
    %v117 = vld [vmem:[#allocation2 + $0xf8] sm:$0xff]
    %v150 = vunpack.c.l.b16 %v86
    %v151 = vunpack.c.h.b16 %v86
    %v152 = vunpack.c.l.b16 %v87
    %v153 = vunpack.c.h.b16 %v87
    %v154 = vunpack.c.l.b16 %v88
    %v155 = vunpack.c.h.b16 %v88
    %v156 = vunpack.c.l.b16 %v89
    %v157 = vunpack.c.h.b16 %v89
    %v158 = vunpack.c.l.b16 %v90
    %v159 = vunpack.c.h.b16 %v90
    %v160 = vunpack.c.l.b16 %v91
    %v161 = vunpack.c.h.b16 %v91
    %v162 = vunpack.c.l.b16 %v92
    %v163 = vunpack.c.h.b16 %v92
    %v164 = vunpack.c.l.b16 %v93
    %v165 = vunpack.c.h.b16 %v93
    %v166 = vunpack.c.l.b16 %v94
    %v167 = vunpack.c.h.b16 %v94
    %v168 = vunpack.c.l.b16 %v95
    %v169 = vunpack.c.h.b16 %v95
    %v170 = vunpack.c.l.b16 %v96
    %v171 = vunpack.c.h.b16 %v96
    %v172 = vunpack.c.l.b16 %v97
    %v173 = vunpack.c.h.b16 %v97
    %v174 = vunpack.c.l.b16 %v98
    %v175 = vunpack.c.h.b16 %v98
    %v176 = vunpack.c.l.b16 %v99
    %v177 = vunpack.c.h.b16 %v99
    %v178 = vunpack.c.l.b16 %v100
    %v179 = vunpack.c.h.b16 %v100
    %v180 = vunpack.c.l.b16 %v101
    %v181 = vunpack.c.h.b16 %v101
    %v182 = vunpack.c.l.b16 %v102
    %v183 = vunpack.c.h.b16 %v102
    %v184 = vunpack.c.l.b16 %v103
    %v185 = vunpack.c.h.b16 %v103
    %v186 = vunpack.c.l.b16 %v104
    %v187 = vunpack.c.h.b16 %v104
    %v188 = vunpack.c.l.b16 %v105
    %v189 = vunpack.c.h.b16 %v105
    %v190 = vunpack.c.l.b16 %v106
    %v191 = vunpack.c.h.b16 %v106
    %v192 = vunpack.c.l.b16 %v107
    %v193 = vunpack.c.h.b16 %v107
    %v194 = vunpack.c.l.b16 %v108
    %v195 = vunpack.c.h.b16 %v108
    %v196 = vunpack.c.l.b16 %v109
    %v197 = vunpack.c.h.b16 %v109
    %v198 = vunpack.c.l.b16 %v110
    %v199 = vunpack.c.h.b16 %v110
    %v200 = vunpack.c.l.b16 %v111
    %v201 = vunpack.c.h.b16 %v111
    %v202 = vunpack.c.l.b16 %v112
    %v203 = vunpack.c.h.b16 %v112
    %v204 = vunpack.c.l.b16 %v113
    %v205 = vunpack.c.h.b16 %v113
    %v206 = vunpack.c.l.b16 %v114
    %v207 = vunpack.c.h.b16 %v114
    %v208 = vunpack.c.l.b16 %v115
    %v209 = vunpack.c.h.b16 %v115
    %v210 = vunpack.c.l.b16 %v116
    %v211 = vunpack.c.h.b16 %v116
    %v212 = vunpack.c.l.b16 %v117
    %v213 = vunpack.c.h.b16 %v117
    %v214 = vpack.c.b16 %v154, %v150
    %v215 = vpack.c.b16 %v155, %v151
    %v216 = vpack.c.b16 %v156, %v152
    %v217 = vpack.c.b16 %v157, %v153
    %v218 = vpack.c.b16 %v162, %v158
    %v219 = vpack.c.b16 %v163, %v159
    %v220 = vpack.c.b16 %v164, %v160
    %v221 = vpack.c.b16 %v165, %v161
    %v222 = vpack.c.b16 %v170, %v166
    %v223 = vpack.c.b16 %v171, %v167
    %v224 = vpack.c.b16 %v172, %v168
    %v225 = vpack.c.b16 %v173, %v169
    %v226 = vpack.c.b16 %v178, %v174
    %v227 = vpack.c.b16 %v179, %v175
    %v228 = vpack.c.b16 %v180, %v176
    %v229 = vpack.c.b16 %v181, %v177
    %v230 = vpack.c.b16 %v186, %v182
    %v231 = vpack.c.b16 %v187, %v183
    %v232 = vpack.c.b16 %v188, %v184
    %v233 = vpack.c.b16 %v189, %v185
    %v234 = vpack.c.b16 %v194, %v190
    %v235 = vpack.c.b16 %v195, %v191
    %v236 = vpack.c.b16 %v196, %v192
    %v237 = vpack.c.b16 %v197, %v193
    %v238 = vpack.c.b16 %v202, %v198
    %v239 = vpack.c.b16 %v203, %v199
    %v240 = vpack.c.b16 %v204, %v200
    %v241 = vpack.c.b16 %v205, %v201
    %v242 = vpack.c.b16 %v210, %v206
    %v243 = vpack.c.b16 %v211, %v207
    %v244 = vpack.c.b16 %v212, %v208
    %v245 = vpack.c.b16 %v213, %v209
    %278 = vmatprep.subr.bf16.mxu0 %v243
    %279 = vmatpush1.bf16.msra.mxu0 %v242
    %280 = vmatprep.subr.bf16.mxu0 %v239
    %281 = vmatpush1.bf16.msra.mxu0 %v238
    %282 = vmatprep.subr.bf16.mxu0 %v235
    %283 = vmatpush1.bf16.msra.mxu0 %v234
    %284 = vmatprep.subr.bf16.mxu0 %v231
    %285 = vmatpush1.bf16.msra.mxu0 %v230
    %286 = vmatprep.subr.bf16.mxu0 %v227
    %287 = vmatpush1.bf16.msra.mxu0 %v226
    %288 = vmatprep.subr.bf16.mxu0 %v223
    %289 = vmatpush1.bf16.msra.mxu0 %v222
    %290 = vmatprep.subr.bf16.mxu0 %v219
    %291 = vmatpush1.bf16.msra.mxu0 %v218
    %292 = vmatprep.subr.bf16.mxu0 %v215
    %293 = vmatpush1.bf16.msra.mxu0 %v214
    %294 = vmatprep.subr.bf16.mxu0 0
    %295 = vmatpush2.bf16.msra.mxu0 0
    %296 = vmatprep.subr.bf16.mxu0 0
    %297 = vmatpush2.bf16.msra.mxu0 0
    %298 = vmatprep.subr.bf16.mxu0 0
    %299 = vmatpush2.bf16.msra.mxu0 0
    %300 = vmatprep.subr.bf16.mxu0 0
    %301 = vmatpush2.bf16.msra.mxu0 0
    %302 = vmatprep.subr.bf16.mxu0 0
    %303 = vmatpush2.bf16.msra.mxu0 0
    %304 = vmatprep.subr.bf16.mxu0 0
    %305 = vmatpush2.bf16.msra.mxu0 0
    %306 = vmatprep.subr.bf16.mxu0 0
    %307 = vmatpush2.bf16.msra.mxu0 0
    %308 = vmatprep.subr.bf16.mxu0 0
    %309 = vmatpush2.bf16.msra.mxu0 0
    %310 = vmatprep.mubr.bf16.mxu0 0
    %311 = vmatmul.mubr.bf16.gmra.mxu0 %v85
    %v312 = vpop.f32.mrf.mxu0
    %v313 = vadd.f32 0.0, %v312
    %v314 = vpop.f32.mrf.mxu0
    %v315 = vadd.f32 0.0, %v314
    %v316 = vpop.f32.mrf.mxu0
    %v317 = vadd.f32 0.0, %v316
    %v318 = vpop.f32.mrf.mxu0
    %v319 = vadd.f32 0.0, %v318
    %320 = vdwg.mxu0
    %321 = vmatprep.subr.bf16.mxu0 %v245
    %322 = vmatpush1.bf16.msra.mxu0 %v244
    %323 = vmatprep.subr.bf16.mxu0 %v241
    %324 = vmatpush1.bf16.msra.mxu0 %v240
    %325 = vmatprep.subr.bf16.mxu0 %v237
    %326 = vmatpush1.bf16.msra.mxu0 %v236
    %327 = vmatprep.subr.bf16.mxu0 %v233
    %328 = vmatpush1.bf16.msra.mxu0 %v232
    %329 = vmatprep.subr.bf16.mxu0 %v229
    %330 = vmatpush1.bf16.msra.mxu0 %v228
    %331 = vmatprep.subr.bf16.mxu0 %v225
    %332 = vmatpush1.bf16.msra.mxu0 %v224
    %333 = vmatprep.subr.bf16.mxu0 %v221
    %334 = vmatpush1.bf16.msra.mxu0 %v220
    %335 = vmatprep.subr.bf16.mxu0 %v217
    %336 = vmatpush1.bf16.msra.mxu0 %v216
    %337 = vmatprep.subr.bf16.mxu0 0
    %338 = vmatpush2.bf16.msra.mxu0 0
    %339 = vmatprep.subr.bf16.mxu0 0
    %340 = vmatpush2.bf16.msra.mxu0 0
    %341 = vmatprep.subr.bf16.mxu0 0
    %342 = vmatpush2.bf16.msra.mxu0 0
    %343 = vmatprep.subr.bf16.mxu0 0
    %344 = vmatpush2.bf16.msra.mxu0 0
    %345 = vmatprep.subr.bf16.mxu0 0
    %346 = vmatpush2.bf16.msra.mxu0 0
    %347 = vmatprep.subr.bf16.mxu0 0
    %348 = vmatpush2.bf16.msra.mxu0 0
    %349 = vmatprep.subr.bf16.mxu0 0
    %350 = vmatpush2.bf16.msra.mxu0 0
    %351 = vmatprep.subr.bf16.mxu0 0
    %352 = vmatpush2.bf16.msra.mxu0 0
    %353 = vmatprep.mubr.bf16.mxu0 0
    %354 = vmatmul.mubr.bf16.gmra.mxu0 %v85
    %v355 = vpop.f32.mrf.mxu0
    %v356 = vadd.f32 0.0, %v355
    %v357 = vpop.f32.mrf.mxu0
    %v358 = vadd.f32 0.0, %v357
    %v359 = vpop.f32.mrf.mxu0
    %v360 = vadd.f32 0.0, %v359
    %v361 = vpop.f32.mrf.mxu0
    %v362 = vadd.f32 0.0, %v361
    %363 = vdwg.mxu0
    %v364 = vld [vmem:[%s5] sm:$0x3]
    %v365 = vld [vmem:[%s6] sm:$0x3]
    %v366 = vld [vmem:[#allocation5] sm:$0xff]
    %v367 = vld [vmem:[#allocation5 + $0x8] sm:$0xff]
    %v368 = vld [vmem:[#allocation5 + $0x10] sm:$0xff]
    %v369 = vld [vmem:[#allocation5 + $0x18] sm:$0xff]
    %v370 = vld [vmem:[#allocation5 + $0x20] sm:$0xff]
    %v371 = vld [vmem:[#allocation5 + $0x28] sm:$0xff]
    %v372 = vld [vmem:[#allocation5 + $0x30] sm:$0xff]
    %v373 = vld [vmem:[#allocation5 + $0x38] sm:$0xff]
    %v374 = vld [vmem:[#allocation5 + $0x40] sm:$0xff]
    %v375 = vld [vmem:[#allocation5 + $0x48] sm:$0xff]
    %v376 = vld [vmem:[#allocation5 + $0x50] sm:$0xff]
    %v377 = vld [vmem:[#allocation5 + $0x58] sm:$0xff]
    %v378 = vld [vmem:[#allocation5 + $0x60] sm:$0xff]
    %v379 = vld [vmem:[#allocation5 + $0x68] sm:$0xff]
    %v380 = vld [vmem:[#allocation5 + $0x70] sm:$0xff]
    %v381 = vld [vmem:[#allocation5 + $0x78] sm:$0xff]
    %v382 = vld [vmem:[#allocation5 + $0x80] sm:$0xff]
    %v383 = vld [vmem:[#allocation5 + $0x88] sm:$0xff]
    %v384 = vld [vmem:[#allocation5 + $0x90] sm:$0xff]
    %v385 = vld [vmem:[#allocation5 + $0x98] sm:$0xff]
    %v386 = vld [vmem:[#allocation5 + $0xa0] sm:$0xff]
    %v387 = vld [vmem:[#allocation5 + $0xa8] sm:$0xff]
    %v388 = vld [vmem:[#allocation5 + $0xb0] sm:$0xff]
    %v389 = vld [vmem:[#allocation5 + $0xb8] sm:$0xff]
    %v390 = vld [vmem:[#allocation5 + $0xc0] sm:$0xff]
    %v391 = vld [vmem:[#allocation5 + $0xc8] sm:$0xff]
    %v392 = vld [vmem:[#allocation5 + $0xd0] sm:$0xff]
    %v393 = vld [vmem:[#allocation5 + $0xd8] sm:$0xff]
    %v394 = vld [vmem:[#allocation5 + $0xe0] sm:$0xff]
    %v395 = vld [vmem:[#allocation5 + $0xe8] sm:$0xff]
    %v396 = vld [vmem:[#allocation5 + $0xf0] sm:$0xff]
    %v397 = vld [vmem:[#allocation5 + $0xf8] sm:$0xff]
    %v398 = vld [vmem:[#allocation5 + $0x100] sm:$0xff]
    %v399 = vld [vmem:[#allocation5 + $0x108] sm:$0xff]
    %v400 = vld [vmem:[#allocation5 + $0x110] sm:$0xff]
    %v401 = vld [vmem:[#allocation5 + $0x118] sm:$0xff]
    %v402 = vld [vmem:[#allocation5 + $0x120] sm:$0xff]
    %v403 = vld [vmem:[#allocation5 + $0x128] sm:$0xff]
    %v404 = vld [vmem:[#allocation5 + $0x130] sm:$0xff]
    %v405 = vld [vmem:[#allocation5 + $0x138] sm:$0xff]
    %v406 = vld [vmem:[#allocation5 + $0x140] sm:$0xff]
    %v407 = vld [vmem:[#allocation5 + $0x148] sm:$0xff]
    %v408 = vld [vmem:[#allocation5 + $0x150] sm:$0xff]
    %v409 = vld [vmem:[#allocation5 + $0x158] sm:$0xff]
    %v410 = vld [vmem:[#allocation5 + $0x160] sm:$0xff]
    %v411 = vld [vmem:[#allocation5 + $0x168] sm:$0xff]
    %v412 = vld [vmem:[#allocation5 + $0x170] sm:$0xff]
    %v413 = vld [vmem:[#allocation5 + $0x178] sm:$0xff]
    %v414 = vld [vmem:[#allocation5 + $0x180] sm:$0xff]
    %v415 = vld [vmem:[#allocation5 + $0x188] sm:$0xff]
    %v416 = vld [vmem:[#allocation5 + $0x190] sm:$0xff]
    %v417 = vld [vmem:[#allocation5 + $0x198] sm:$0xff]
    %v418 = vld [vmem:[#allocation5 + $0x1a0] sm:$0xff]
    %v419 = vld [vmem:[#allocation5 + $0x1a8] sm:$0xff]
    %v420 = vld [vmem:[#allocation5 + $0x1b0] sm:$0xff]
    %v421 = vld [vmem:[#allocation5 + $0x1b8] sm:$0xff]
    %v422 = vld [vmem:[#allocation5 + $0x1c0] sm:$0xff]
    %v423 = vld [vmem:[#allocation5 + $0x1c8] sm:$0xff]
    %v424 = vld [vmem:[#allocation5 + $0x1d0] sm:$0xff]
    %v425 = vld [vmem:[#allocation5 + $0x1d8] sm:$0xff]
    %v426 = vld [vmem:[#allocation5 + $0x1e0] sm:$0xff]
    %v427 = vld [vmem:[#allocation5 + $0x1e8] sm:$0xff]
    %v428 = vld [vmem:[#allocation5 + $0x1f0] sm:$0xff]
    %v429 = vld [vmem:[#allocation5 + $0x1f8] sm:$0xff]
    %430 = vmatprep.subr.mxu0 %v427
    %431 = vmatpush1.msra.mxu0 %v426
    %432 = vmatprep.subr.mxu0 %v423
    %433 = vmatpush1.msra.mxu0 %v422
    %434 = vmatprep.subr.mxu0 %v419
    %435 = vmatpush1.msra.mxu0 %v418
    %436 = vmatprep.subr.mxu0 %v415
    %437 = vmatpush1.msra.mxu0 %v414
    %438 = vmatprep.subr.mxu0 %v411
    %439 = vmatpush1.msra.mxu0 %v410
    %440 = vmatprep.subr.mxu0 %v407
    %441 = vmatpush1.msra.mxu0 %v406
    %442 = vmatprep.subr.mxu0 %v403
    %443 = vmatpush1.msra.mxu0 %v402
    %444 = vmatprep.subr.mxu0 %v399
    %445 = vmatpush1.msra.mxu0 %v398
    %446 = vmatprep.subr.mxu0 %v395
    %447 = vmatpush1.msra.mxu0 %v394
    %448 = vmatprep.subr.mxu0 %v391
    %449 = vmatpush1.msra.mxu0 %v390
    %450 = vmatprep.subr.mxu0 %v387
    %451 = vmatpush1.msra.mxu0 %v386
    %452 = vmatprep.subr.mxu0 %v383
    %453 = vmatpush1.msra.mxu0 %v382
    %454 = vmatprep.subr.mxu0 %v379
    %455 = vmatpush1.msra.mxu0 %v378
    %456 = vmatprep.subr.mxu0 %v375
    %457 = vmatpush1.msra.mxu0 %v374
    %458 = vmatprep.subr.mxu0 %v371
    %459 = vmatpush1.msra.mxu0 %v370
    %460 = vmatprep.subr.mxu0 %v367
    %461 = vmatpush1.msra.mxu0 %v366
    %462 = vmatprep.subr.mxu0 0.0
    %463 = vmatpush2.msra.mxu0 0.0
    %464 = vmatprep.subr.mxu0 0.0
    %465 = vmatpush2.msra.mxu0 0.0
    %466 = vmatprep.subr.mxu0 0.0
    %467 = vmatpush2.msra.mxu0 0.0
    %468 = vmatprep.subr.mxu0 0.0
    %469 = vmatpush2.msra.mxu0 0.0
    %470 = vmatprep.subr.mxu0 0.0
    %471 = vmatpush2.msra.mxu0 0.0
    %472 = vmatprep.subr.mxu0 0.0
    %473 = vmatpush2.msra.mxu0 0.0
    %474 = vmatprep.subr.mxu0 0.0
    %475 = vmatpush2.msra.mxu0 0.0
    %476 = vmatprep.subr.mxu0 0.0
    %477 = vmatpush2.msra.mxu0 0.0
    %478 = vmatprep.subr.mxu0 0.0
    %479 = vmatpush2.msra.mxu0 0.0
    %480 = vmatprep.subr.mxu0 0.0
    %481 = vmatpush2.msra.mxu0 0.0
    %482 = vmatprep.subr.mxu0 0.0
    %483 = vmatpush2.msra.mxu0 0.0
    %484 = vmatprep.subr.mxu0 0.0
    %485 = vmatpush2.msra.mxu0 0.0
    %486 = vmatprep.subr.mxu0 0.0
    %487 = vmatpush2.msra.mxu0 0.0
    %488 = vmatprep.subr.mxu0 0.0
    %489 = vmatpush2.msra.mxu0 0.0
    %490 = vmatprep.subr.mxu0 0.0
    %491 = vmatpush2.msra.mxu0 0.0
    %492 = vmatprep.subr.mxu0 0.0
    %493 = vmatpush2.msra.mxu0 0.0
    %494 = vmatprep.mubr.f32.mxu0 0.0
    %495 = vmatmul.mubr.f32.gmra.mxu0 %v364
    %v496 = vpop.f32.mrf.mxu0
    %v497 = vadd.f32 0.0, %v496
    %v498 = vpop.f32.mrf.mxu0
    %v499 = vadd.f32 0.0, %v498
    %500 = vdwg.mxu0
    %501 = vmatprep.subr.mxu0 %v429
    %502 = vmatpush1.msra.mxu0 %v428
    %503 = vmatprep.subr.mxu0 %v425
    %504 = vmatpush1.msra.mxu0 %v424
    %505 = vmatprep.subr.mxu0 %v421
    %506 = vmatpush1.msra.mxu0 %v420
    %507 = vmatprep.subr.mxu0 %v417
    %508 = vmatpush1.msra.mxu0 %v416
    %509 = vmatprep.subr.mxu0 %v413
    %510 = vmatpush1.msra.mxu0 %v412
    %511 = vmatprep.subr.mxu0 %v409
    %512 = vmatpush1.msra.mxu0 %v408
    %513 = vmatprep.subr.mxu0 %v405
    %514 = vmatpush1.msra.mxu0 %v404
    %515 = vmatprep.subr.mxu0 %v401
    %516 = vmatpush1.msra.mxu0 %v400
    %517 = vmatprep.subr.mxu0 %v397
    %518 = vmatpush1.msra.mxu0 %v396
    %519 = vmatprep.subr.mxu0 %v393
    %520 = vmatpush1.msra.mxu0 %v392
    %521 = vmatprep.subr.mxu0 %v389
    %522 = vmatpush1.msra.mxu0 %v388
    %523 = vmatprep.subr.mxu0 %v385
    %524 = vmatpush1.msra.mxu0 %v384
    %525 = vmatprep.subr.mxu0 %v381
    %526 = vmatpush1.msra.mxu0 %v380
    %527 = vmatprep.subr.mxu0 %v377
    %528 = vmatpush1.msra.mxu0 %v376
    %529 = vmatprep.subr.mxu0 %v373
    %530 = vmatpush1.msra.mxu0 %v372
    %531 = vmatprep.subr.mxu0 %v369
    %532 = vmatpush1.msra.mxu0 %v368
    %533 = vmatprep.subr.mxu0 0.0
    %534 = vmatpush2.msra.mxu0 0.0
    %535 = vmatprep.subr.mxu0 0.0
    %536 = vmatpush2.msra.mxu0 0.0
    %537 = vmatprep.subr.mxu0 0.0
    %538 = vmatpush2.msra.mxu0 0.0
    %539 = vmatprep.subr.mxu0 0.0
    %540 = vmatpush2.msra.mxu0 0.0
    %541 = vmatprep.subr.mxu0 0.0
    %542 = vmatpush2.msra.mxu0 0.0
    %543 = vmatprep.subr.mxu0 0.0
    %544 = vmatpush2.msra.mxu0 0.0
    %545 = vmatprep.subr.mxu0 0.0
    %546 = vmatpush2.msra.mxu0 0.0
    %547 = vmatprep.subr.mxu0 0.0
    %548 = vmatpush2.msra.mxu0 0.0
    %549 = vmatprep.subr.mxu0 0.0
    %550 = vmatpush2.msra.mxu0 0.0
    %551 = vmatprep.subr.mxu0 0.0
    %552 = vmatpush2.msra.mxu0 0.0
    %553 = vmatprep.subr.mxu0 0.0
    %554 = vmatpush2.msra.mxu0 0.0
    %555 = vmatprep.subr.mxu0 0.0
    %556 = vmatpush2.msra.mxu0 0.0
    %557 = vmatprep.subr.mxu0 0.0
    %558 = vmatpush2.msra.mxu0 0.0
    %559 = vmatprep.subr.mxu0 0.0
    %560 = vmatpush2.msra.mxu0 0.0
    %561 = vmatprep.subr.mxu0 0.0
    %562 = vmatpush2.msra.mxu0 0.0
    %563 = vmatprep.subr.mxu0 0.0
    %564 = vmatpush2.msra.mxu0 0.0
    %565 = vmatprep.mubr.f32.mxu0 0.0
    %566 = vmatmul.mubr.f32.gmra.mxu0 %v364
    %v567 = vpop.f32.mrf.mxu0
    %v568 = vadd.f32 0.0, %v567
    %v569 = vpop.f32.mrf.mxu0
    %v570 = vadd.f32 0.0, %v569
    %571 = vdwg.mxu0
    %v572 = vadd.f32 %v313, %v497
    %v573 = vadd.f32 %v315, %v499
    %v574 = vadd.f32 %v356, %v568
    %v575 = vadd.f32 %v358, %v570
    %v576 = vxor.u32 %v572, 2147483648
    %v577 = vmul.f32 %v576, 1.442695
    %v578 = vpow.pop %v577
    %v579 = vadd.f32 %v578, 1.0
    %v580 = vrcp.pop %v579
    %v581 = vmul.f32 1.0, %v580
    %v582 = vxor.u32 %v573, 2147483648
    %v583 = vmul.f32 %v582, 1.442695
    %v584 = vpow.pop %v583
    %v585 = vadd.f32 %v584, 1.0
    %v586 = vrcp.pop %v585
    %v587 = vmul.f32 1.0, %v586
    %v588 = vtanh.pop %v574
    %v589 = vxor.u32 %v575, 2147483648
    %v590 = vmul.f32 %v589, 1.442695
    %v591 = vpow.pop %v590
    %v592 = vadd.f32 %v591, 1.0
    %v593 = vrcp.pop %v592
    %v594 = vmul.f32 1.0, %v593
    %v595 = vmul.f32 %v587, %v365
    %v596 = vmul.f32 %v581, %v588
    %v597 = vadd.f32 %v595, %v596
    %v598 = vtanh.pop %v597
    %v599 = vmul.f32 %v594, %v598
    %600 = vmatprep.subr.mxu0 %v427
    %601 = vmatpush1.msra.mxu0 %v426
    %602 = vmatprep.subr.mxu0 %v423
    %603 = vmatpush1.msra.mxu0 %v422
    %604 = vmatprep.subr.mxu0 %v419
    %605 = vmatpush1.msra.mxu0 %v418
    %606 = vmatprep.subr.mxu0 %v415
    %607 = vmatpush1.msra.mxu0 %v414
    %608 = vmatprep.subr.mxu0 %v411
    %609 = vmatpush1.msra.mxu0 %v410
    %610 = vmatprep.subr.mxu0 %v407
    %611 = vmatpush1.msra.mxu0 %v406
    %612 = vmatprep.subr.mxu0 %v403
    %613 = vmatpush1.msra.mxu0 %v402
    %614 = vmatprep.subr.mxu0 %v399
    %615 = vmatpush1.msra.mxu0 %v398
    %616 = vmatprep.subr.mxu0 %v395
    %617 = vmatpush1.msra.mxu0 %v394
    %618 = vmatprep.subr.mxu0 %v391
    %619 = vmatpush1.msra.mxu0 %v390
    %620 = vmatprep.subr.mxu0 %v387
    %621 = vmatpush1.msra.mxu0 %v386
    %622 = vmatprep.subr.mxu0 %v383
    %623 = vmatpush1.msra.mxu0 %v382
    %624 = vmatprep.subr.mxu0 %v379
    %625 = vmatpush1.msra.mxu0 %v378
    %626 = vmatprep.subr.mxu0 %v375
    %627 = vmatpush1.msra.mxu0 %v374
    %628 = vmatprep.subr.mxu0 %v371
    %629 = vmatpush1.msra.mxu0 %v370
    %630 = vmatprep.subr.mxu0 %v367
    %631 = vmatpush1.msra.mxu0 %v366
    %632 = vmatprep.subr.mxu0 0.0
    %633 = vmatpush2.msra.mxu0 0.0
    %634 = vmatprep.subr.mxu0 0.0
    %635 = vmatpush2.msra.mxu0 0.0
    %636 = vmatprep.subr.mxu0 0.0
    %637 = vmatpush2.msra.mxu0 0.0
    %638 = vmatprep.subr.mxu0 0.0
    %639 = vmatpush2.msra.mxu0 0.0
    %640 = vmatprep.subr.mxu0 0.0
    %641 = vmatpush2.msra.mxu0 0.0
    %642 = vmatprep.subr.mxu0 0.0
    %643 = vmatpush2.msra.mxu0 0.0
    %644 = vmatprep.subr.mxu0 0.0
    %645 = vmatpush2.msra.mxu0 0.0
    %646 = vmatprep.subr.mxu0 0.0
    %647 = vmatpush2.msra.mxu0 0.0
    %648 = vmatprep.subr.mxu0 0.0
    %649 = vmatpush2.msra.mxu0 0.0
    %650 = vmatprep.subr.mxu0 0.0
    %651 = vmatpush2.msra.mxu0 0.0
    %652 = vmatprep.subr.mxu0 0.0
    %653 = vmatpush2.msra.mxu0 0.0
    %654 = vmatprep.subr.mxu0 0.0
    %655 = vmatpush2.msra.mxu0 0.0
    %656 = vmatprep.subr.mxu0 0.0
    %657 = vmatpush2.msra.mxu0 0.0
    %658 = vmatprep.subr.mxu0 0.0
    %659 = vmatpush2.msra.mxu0 0.0
    %660 = vmatprep.subr.mxu0 0.0
    %661 = vmatpush2.msra.mxu0 0.0
    %662 = vmatprep.subr.mxu0 0.0
    %663 = vmatpush2.msra.mxu0 0.0
    %664 = vmatprep.mubr.f32.mxu0 0.0
    %665 = vmatmul.mubr.f32.gmra.mxu0 %v599
    %v666 = vpop.f32.mrf.mxu0
    %v667 = vadd.f32 0.0, %v666
    %v668 = vpop.f32.mrf.mxu0
    %v669 = vadd.f32 0.0, %v668
    %670 = vdwg.mxu0
    %671 = vmatprep.subr.mxu0 %v429
    %672 = vmatpush1.msra.mxu0 %v428
    %673 = vmatprep.subr.mxu0 %v425
    %674 = vmatpush1.msra.mxu0 %v424
    %675 = vmatprep.subr.mxu0 %v421
    %676 = vmatpush1.msra.mxu0 %v420
    %677 = vmatprep.subr.mxu0 %v417
    %678 = vmatpush1.msra.mxu0 %v416
    %679 = vmatprep.subr.mxu0 %v413
    %680 = vmatpush1.msra.mxu0 %v412
    %681 = vmatprep.subr.mxu0 %v409
    %682 = vmatpush1.msra.mxu0 %v408
    %683 = vmatprep.subr.mxu0 %v405
    %684 = vmatpush1.msra.mxu0 %v404
    %685 = vmatprep.subr.mxu0 %v401
    %686 = vmatpush1.msra.mxu0 %v400
    %687 = vmatprep.subr.mxu0 %v397
    %688 = vmatpush1.msra.mxu0 %v396
    %689 = vmatprep.subr.mxu0 %v393
    %690 = vmatpush1.msra.mxu0 %v392
    %691 = vmatprep.subr.mxu0 %v389
    %692 = vmatpush1.msra.mxu0 %v388
    %693 = vmatprep.subr.mxu0 %v385
    %694 = vmatpush1.msra.mxu0 %v384
    %695 = vmatprep.subr.mxu0 %v381
    %696 = vmatpush1.msra.mxu0 %v380
    %697 = vmatprep.subr.mxu0 %v377
    %698 = vmatpush1.msra.mxu0 %v376
    %699 = vmatprep.subr.mxu0 %v373
    %700 = vmatpush1.msra.mxu0 %v372
    %701 = vmatprep.subr.mxu0 %v369
    %702 = vmatpush1.msra.mxu0 %v368
    %703 = vmatprep.subr.mxu0 0.0
    %704 = vmatpush2.msra.mxu0 0.0
    %705 = vmatprep.subr.mxu0 0.0
    %706 = vmatpush2.msra.mxu0 0.0
    %707 = vmatprep.subr.mxu0 0.0
    %708 = vmatpush2.msra.mxu0 0.0
    %709 = vmatprep.subr.mxu0 0.0
    %710 = vmatpush2.msra.mxu0 0.0
    %711 = vmatprep.subr.mxu0 0.0
    %712 = vmatpush2.msra.mxu0 0.0
    %713 = vmatprep.subr.mxu0 0.0
    %714 = vmatpush2.msra.mxu0 0.0
    %715 = vmatprep.subr.mxu0 0.0
    %716 = vmatpush2.msra.mxu0 0.0
    %717 = vmatprep.subr.mxu0 0.0
    %718 = vmatpush2.msra.mxu0 0.0
    %719 = vmatprep.subr.mxu0 0.0
    %720 = vmatpush2.msra.mxu0 0.0
    %721 = vmatprep.subr.mxu0 0.0
    %722 = vmatpush2.msra.mxu0 0.0
    %723 = vmatprep.subr.mxu0 0.0
    %724 = vmatpush2.msra.mxu0 0.0
    %725 = vmatprep.subr.mxu0 0.0
    %726 = vmatpush2.msra.mxu0 0.0
    %727 = vmatprep.subr.mxu0 0.0
    %728 = vmatpush2.msra.mxu0 0.0
    %729 = vmatprep.subr.mxu0 0.0
    %730 = vmatpush2.msra.mxu0 0.0
    %731 = vmatprep.subr.mxu0 0.0
    %732 = vmatpush2.msra.mxu0 0.0
    %733 = vmatprep.subr.mxu0 0.0
    %734 = vmatpush2.msra.mxu0 0.0
    %735 = vmatprep.mubr.f32.mxu0 0.0
    %736 = vmatmul.mubr.f32.gmra.mxu0 %v599
    %v737 = vpop.f32.mrf.mxu0
    %v738 = vadd.f32 0.0, %v737
    %v739 = vpop.f32.mrf.mxu0
    %v740 = vadd.f32 0.0, %v739
    %741 = vdwg.mxu0
    %v746 = vrot.slane %v667, 6
    %v747 = vrot.slane %v669, 6
    %v748 = vrot.slane %v738, 6
    %v749 = vrot.slane %v740, 6
    %v754 = vadd.f32 %v313, %v746
    %v755 = vadd.f32 %v315, %v747
    %v756 = vadd.f32 %v356, %v748
    %v757 = vadd.f32 %v358, %v749
    %v758 = vxor.u32 %v754, 2147483648
    %v759 = vmul.f32 %v758, 1.442695
    %v760 = vpow.pop %v759
    %v761 = vadd.f32 %v760, 1.0
    %v762 = vrcp.pop %v761
    %v763 = vmul.f32 1.0, %v762
    %v764 = vxor.u32 %v755, 2147483648
    %v765 = vmul.f32 %v764, 1.442695
    %v766 = vpow.pop %v765
    %v767 = vadd.f32 %v766, 1.0
    %v768 = vrcp.pop %v767
    %v769 = vmul.f32 1.0, %v768
    %v770 = vtanh.pop %v756
    %v771 = vxor.u32 %v757, 2147483648
    %v772 = vmul.f32 %v771, 1.442695
    %v773 = vpow.pop %v772
    %v774 = vadd.f32 %v773, 1.0
    %v775 = vrcp.pop %v774
    %v776 = vmul.f32 1.0, %v775
    %v778 = vrot.slane %v597, 6
    %v780 = vmul.f32 %v769, %v778
    %v781 = vmul.f32 %v763, %v770
    %v782 = vadd.f32 %v780, %v781
    %v783 = vtanh.pop %v782
    %v784 = vmul.f32 %v776, %v783
    %v786 = vrot.slane %v784, 2
    %788 = vmatprep.subr.mxu0 %v427
    %789 = vmatpush1.msra.mxu0 %v426
    %790 = vmatprep.subr.mxu0 %v423
    %791 = vmatpush1.msra.mxu0 %v422
    %792 = vmatprep.subr.mxu0 %v419
    %793 = vmatpush1.msra.mxu0 %v418
    %794 = vmatprep.subr.mxu0 %v415
    %795 = vmatpush1.msra.mxu0 %v414
    %796 = vmatprep.subr.mxu0 %v411
    %797 = vmatpush1.msra.mxu0 %v410
    %798 = vmatprep.subr.mxu0 %v407
    %799 = vmatpush1.msra.mxu0 %v406
    %800 = vmatprep.subr.mxu0 %v403
    %801 = vmatpush1.msra.mxu0 %v402
    %802 = vmatprep.subr.mxu0 %v399
    %803 = vmatpush1.msra.mxu0 %v398
    %804 = vmatprep.subr.mxu0 %v395
    %805 = vmatpush1.msra.mxu0 %v394
    %806 = vmatprep.subr.mxu0 %v391
    %807 = vmatpush1.msra.mxu0 %v390
    %808 = vmatprep.subr.mxu0 %v387
    %809 = vmatpush1.msra.mxu0 %v386
    %810 = vmatprep.subr.mxu0 %v383
    %811 = vmatpush1.msra.mxu0 %v382
    %812 = vmatprep.subr.mxu0 %v379
    %813 = vmatpush1.msra.mxu0 %v378
    %814 = vmatprep.subr.mxu0 %v375
    %815 = vmatpush1.msra.mxu0 %v374
    %816 = vmatprep.subr.mxu0 %v371
    %817 = vmatpush1.msra.mxu0 %v370
    %818 = vmatprep.subr.mxu0 %v367
    %819 = vmatpush1.msra.mxu0 %v366
    %820 = vmatprep.subr.mxu0 0.0
    %821 = vmatpush2.msra.mxu0 0.0
    %822 = vmatprep.subr.mxu0 0.0
    %823 = vmatpush2.msra.mxu0 0.0
    %824 = vmatprep.subr.mxu0 0.0
    %825 = vmatpush2.msra.mxu0 0.0
    %826 = vmatprep.subr.mxu0 0.0
    %827 = vmatpush2.msra.mxu0 0.0
    %828 = vmatprep.subr.mxu0 0.0
    %829 = vmatpush2.msra.mxu0 0.0
    %830 = vmatprep.subr.mxu0 0.0
    %831 = vmatpush2.msra.mxu0 0.0
    %832 = vmatprep.subr.mxu0 0.0
    %833 = vmatpush2.msra.mxu0 0.0
    %834 = vmatprep.subr.mxu0 0.0
    %835 = vmatpush2.msra.mxu0 0.0
    %836 = vmatprep.subr.mxu0 0.0
    %837 = vmatpush2.msra.mxu0 0.0
    %838 = vmatprep.subr.mxu0 0.0
    %839 = vmatpush2.msra.mxu0 0.0
    %840 = vmatprep.subr.mxu0 0.0
    %841 = vmatpush2.msra.mxu0 0.0
    %842 = vmatprep.subr.mxu0 0.0
    %843 = vmatpush2.msra.mxu0 0.0
    %844 = vmatprep.subr.mxu0 0.0
    %845 = vmatpush2.msra.mxu0 0.0
    %846 = vmatprep.subr.mxu0 0.0
    %847 = vmatpush2.msra.mxu0 0.0
    %848 = vmatprep.subr.mxu0 0.0
    %849 = vmatpush2.msra.mxu0 0.0
    %850 = vmatprep.subr.mxu0 0.0
    %851 = vmatpush2.msra.mxu0 0.0
    %852 = vmatprep.mubr.f32.mxu0 0.0
    %853 = vmatmul.mubr.f32.gmra.mxu0 %v786
    %v854 = vpop.f32.mrf.mxu0
    %v855 = vadd.f32 0.0, %v854
    %v856 = vpop.f32.mrf.mxu0
    %v857 = vadd.f32 0.0, %v856
    %858 = vdwg.mxu0
    %859 = vmatprep.subr.mxu0 %v429
    %860 = vmatpush1.msra.mxu0 %v428
    %861 = vmatprep.subr.mxu0 %v425
    %862 = vmatpush1.msra.mxu0 %v424
    %863 = vmatprep.subr.mxu0 %v421
    %864 = vmatpush1.msra.mxu0 %v420
    %865 = vmatprep.subr.mxu0 %v417
    %866 = vmatpush1.msra.mxu0 %v416
    %867 = vmatprep.subr.mxu0 %v413
    %868 = vmatpush1.msra.mxu0 %v412
    %869 = vmatprep.subr.mxu0 %v409
    %870 = vmatpush1.msra.mxu0 %v408
    %871 = vmatprep.subr.mxu0 %v405
    %872 = vmatpush1.msra.mxu0 %v404
    %873 = vmatprep.subr.mxu0 %v401
    %874 = vmatpush1.msra.mxu0 %v400
    %875 = vmatprep.subr.mxu0 %v397
    %876 = vmatpush1.msra.mxu0 %v396
    %877 = vmatprep.subr.mxu0 %v393
    %878 = vmatpush1.msra.mxu0 %v392
    %879 = vmatprep.subr.mxu0 %v389
    %880 = vmatpush1.msra.mxu0 %v388
    %881 = vmatprep.subr.mxu0 %v385
    %882 = vmatpush1.msra.mxu0 %v384
    %883 = vmatprep.subr.mxu0 %v381
    %884 = vmatpush1.msra.mxu0 %v380
    %885 = vmatprep.subr.mxu0 %v377
    %886 = vmatpush1.msra.mxu0 %v376
    %887 = vmatprep.subr.mxu0 %v373
    %888 = vmatpush1.msra.mxu0 %v372
    %889 = vmatprep.subr.mxu0 %v369
    %890 = vmatpush1.msra.mxu0 %v368
    %891 = vmatprep.subr.mxu0 0.0
    %892 = vmatpush2.msra.mxu0 0.0
    %893 = vmatprep.subr.mxu0 0.0
    %894 = vmatpush2.msra.mxu0 0.0
    %895 = vmatprep.subr.mxu0 0.0
    %896 = vmatpush2.msra.mxu0 0.0
    %897 = vmatprep.subr.mxu0 0.0
    %898 = vmatpush2.msra.mxu0 0.0
    %899 = vmatprep.subr.mxu0 0.0
    %900 = vmatpush2.msra.mxu0 0.0
    %901 = vmatprep.subr.mxu0 0.0
    %902 = vmatpush2.msra.mxu0 0.0
    %903 = vmatprep.subr.mxu0 0.0
    %904 = vmatpush2.msra.mxu0 0.0
    %905 = vmatprep.subr.mxu0 0.0
    %906 = vmatpush2.msra.mxu0 0.0
    %907 = vmatprep.subr.mxu0 0.0
    %908 = vmatpush2.msra.mxu0 0.0
    %909 = vmatprep.subr.mxu0 0.0
    %910 = vmatpush2.msra.mxu0 0.0
    %911 = vmatprep.subr.mxu0 0.0
    %912 = vmatpush2.msra.mxu0 0.0
    %913 = vmatprep.subr.mxu0 0.0
    %914 = vmatpush2.msra.mxu0 0.0
    %915 = vmatprep.subr.mxu0 0.0
    %916 = vmatpush2.msra.mxu0 0.0
    %917 = vmatprep.subr.mxu0 0.0
    %918 = vmatpush2.msra.mxu0 0.0
    %919 = vmatprep.subr.mxu0 0.0
    %920 = vmatpush2.msra.mxu0 0.0
    %921 = vmatprep.subr.mxu0 0.0
    %922 = vmatpush2.msra.mxu0 0.0
    %923 = vmatprep.mubr.f32.mxu0 0.0
    %924 = vmatmul.mubr.f32.gmra.mxu0 %v786
    %v925 = vpop.f32.mrf.mxu0
    %v926 = vadd.f32 0.0, %v925
    %v927 = vpop.f32.mrf.mxu0
    %v928 = vadd.f32 0.0, %v927
    %929 = vdwg.mxu0
    %v934 = vrot.slane %v855, 4
    %v935 = vrot.slane %v857, 4
    %v936 = vrot.slane %v926, 4
    %v937 = vrot.slane %v928, 4
    %v942 = vadd.f32 %v313, %v934
    %v943 = vadd.f32 %v315, %v935
    %v944 = vadd.f32 %v356, %v936
    %v945 = vadd.f32 %v358, %v937
    %v946 = vxor.u32 %v942, 2147483648
    %v947 = vmul.f32 %v946, 1.442695
    %v948 = vpow.pop %v947
    %v949 = vadd.f32 %v948, 1.0
    %v950 = vrcp.pop %v949
    %v951 = vmul.f32 1.0, %v950
    %v952 = vxor.u32 %v943, 2147483648
    %v953 = vmul.f32 %v952, 1.442695
    %v954 = vpow.pop %v953
    %v955 = vadd.f32 %v954, 1.0
    %v956 = vrcp.pop %v955
    %v957 = vmul.f32 1.0, %v956
    %v958 = vtanh.pop %v944
    %v959 = vxor.u32 %v945, 2147483648
    %v960 = vmul.f32 %v959, 1.442695
    %v961 = vpow.pop %v960
    %v962 = vadd.f32 %v961, 1.0
    %v963 = vrcp.pop %v962
    %v964 = vmul.f32 1.0, %v963
    %v966 = vrot.slane %v782, 6
    %v968 = vmul.f32 %v957, %v966
    %v969 = vmul.f32 %v951, %v958
    %v970 = vadd.f32 %v968, %v969
    %v971 = vtanh.pop %v970
    %v972 = vmul.f32 %v964, %v971
    %v974 = vrot.slane %v972, 4
    %976 = vmatprep.subr.mxu0 %v427
    %977 = vmatpush1.msra.mxu0 %v426
    %978 = vmatprep.subr.mxu0 %v423
    %979 = vmatpush1.msra.mxu0 %v422
    %980 = vmatprep.subr.mxu0 %v419
    %981 = vmatpush1.msra.mxu0 %v418
    %982 = vmatprep.subr.mxu0 %v415
    %983 = vmatpush1.msra.mxu0 %v414
    %984 = vmatprep.subr.mxu0 %v411
    %985 = vmatpush1.msra.mxu0 %v410
    %986 = vmatprep.subr.mxu0 %v407
    %987 = vmatpush1.msra.mxu0 %v406
    %988 = vmatprep.subr.mxu0 %v403
    %989 = vmatpush1.msra.mxu0 %v402
    %990 = vmatprep.subr.mxu0 %v399
    %991 = vmatpush1.msra.mxu0 %v398
    %992 = vmatprep.subr.mxu0 %v395
    %993 = vmatpush1.msra.mxu0 %v394
    %994 = vmatprep.subr.mxu0 %v391
    %995 = vmatpush1.msra.mxu0 %v390
    %996 = vmatprep.subr.mxu0 %v387
    %997 = vmatpush1.msra.mxu0 %v386
    %998 = vmatprep.subr.mxu0 %v383
    %999 = vmatpush1.msra.mxu0 %v382
    %1000 = vmatprep.subr.mxu0 %v379
    %1001 = vmatpush1.msra.mxu0 %v378
    %1002 = vmatprep.subr.mxu0 %v375
    %1003 = vmatpush1.msra.mxu0 %v374
    %1004 = vmatprep.subr.mxu0 %v371
    %1005 = vmatpush1.msra.mxu0 %v370
    %1006 = vmatprep.subr.mxu0 %v367
    %1007 = vmatpush1.msra.mxu0 %v366
    %1008 = vmatprep.subr.mxu0 0.0
    %1009 = vmatpush2.msra.mxu0 0.0
    %1010 = vmatprep.subr.mxu0 0.0
    %1011 = vmatpush2.msra.mxu0 0.0
    %1012 = vmatprep.subr.mxu0 0.0
    %1013 = vmatpush2.msra.mxu0 0.0
    %1014 = vmatprep.subr.mxu0 0.0
    %1015 = vmatpush2.msra.mxu0 0.0
    %1016 = vmatprep.subr.mxu0 0.0
    %1017 = vmatpush2.msra.mxu0 0.0
    %1018 = vmatprep.subr.mxu0 0.0
    %1019 = vmatpush2.msra.mxu0 0.0
    %1020 = vmatprep.subr.mxu0 0.0
    %1021 = vmatpush2.msra.mxu0 0.0
    %1022 = vmatprep.subr.mxu0 0.0
    %1023 = vmatpush2.msra.mxu0 0.0
    %1024 = vmatprep.subr.mxu0 0.0
    %1025 = vmatpush2.msra.mxu0 0.0
    %1026 = vmatprep.subr.mxu0 0.0
    %1027 = vmatpush2.msra.mxu0 0.0
    %1028 = vmatprep.subr.mxu0 0.0
    %1029 = vmatpush2.msra.mxu0 0.0
    %1030 = vmatprep.subr.mxu0 0.0
    %1031 = vmatpush2.msra.mxu0 0.0
    %1032 = vmatprep.subr.mxu0 0.0
    %1033 = vmatpush2.msra.mxu0 0.0
    %1034 = vmatprep.subr.mxu0 0.0
    %1035 = vmatpush2.msra.mxu0 0.0
    %1036 = vmatprep.subr.mxu0 0.0
    %1037 = vmatpush2.msra.mxu0 0.0
    %1038 = vmatprep.subr.mxu0 0.0
    %1039 = vmatpush2.msra.mxu0 0.0
    %1040 = vmatprep.mubr.f32.mxu0 0.0
    %1041 = vmatmul.mubr.f32.gmra.mxu0 %v974
    %v1042 = vpop.f32.mrf.mxu0
    %v1043 = vadd.f32 0.0, %v1042
    %v1044 = vpop.f32.mrf.mxu0
    %v1045 = vadd.f32 0.0, %v1044
    %1046 = vdwg.mxu0
    %1047 = vmatprep.subr.mxu0 %v429
    %1048 = vmatpush1.msra.mxu0 %v428
    %1049 = vmatprep.subr.mxu0 %v425
    %1050 = vmatpush1.msra.mxu0 %v424
    %1051 = vmatprep.subr.mxu0 %v421
    %1052 = vmatpush1.msra.mxu0 %v420
    %1053 = vmatprep.subr.mxu0 %v417
    %1054 = vmatpush1.msra.mxu0 %v416
    %1055 = vmatprep.subr.mxu0 %v413
    %1056 = vmatpush1.msra.mxu0 %v412
    %1057 = vmatprep.subr.mxu0 %v409
    %1058 = vmatpush1.msra.mxu0 %v408
    %1059 = vmatprep.subr.mxu0 %v405
    %1060 = vmatpush1.msra.mxu0 %v404
    %1061 = vmatprep.subr.mxu0 %v401
    %1062 = vmatpush1.msra.mxu0 %v400
    %1063 = vmatprep.subr.mxu0 %v397
    %1064 = vmatpush1.msra.mxu0 %v396
    %1065 = vmatprep.subr.mxu0 %v393
    %1066 = vmatpush1.msra.mxu0 %v392
    %1067 = vmatprep.subr.mxu0 %v389
    %1068 = vmatpush1.msra.mxu0 %v388
    %1069 = vmatprep.subr.mxu0 %v385
    %1070 = vmatpush1.msra.mxu0 %v384
    %1071 = vmatprep.subr.mxu0 %v381
    %1072 = vmatpush1.msra.mxu0 %v380
    %1073 = vmatprep.subr.mxu0 %v377
    %1074 = vmatpush1.msra.mxu0 %v376
    %1075 = vmatprep.subr.mxu0 %v373
    %1076 = vmatpush1.msra.mxu0 %v372
    %1077 = vmatprep.subr.mxu0 %v369
    %1078 = vmatpush1.msra.mxu0 %v368
    %1079 = vmatprep.subr.mxu0 0.0
    %1080 = vmatpush2.msra.mxu0 0.0
    %1081 = vmatprep.subr.mxu0 0.0
    %1082 = vmatpush2.msra.mxu0 0.0
    %1083 = vmatprep.subr.mxu0 0.0
    %1084 = vmatpush2.msra.mxu0 0.0
    %1085 = vmatprep.subr.mxu0 0.0
    %1086 = vmatpush2.msra.mxu0 0.0
    %1087 = vmatprep.subr.mxu0 0.0
    %1088 = vmatpush2.msra.mxu0 0.0
    %1089 = vmatprep.subr.mxu0 0.0
    %1090 = vmatpush2.msra.mxu0 0.0
    %1091 = vmatprep.subr.mxu0 0.0
    %1092 = vmatpush2.msra.mxu0 0.0
    %1093 = vmatprep.subr.mxu0 0.0
    %1094 = vmatpush2.msra.mxu0 0.0
    %1095 = vmatprep.subr.mxu0 0.0
    %1096 = vmatpush2.msra.mxu0 0.0
    %1097 = vmatprep.subr.mxu0 0.0
    %1098 = vmatpush2.msra.mxu0 0.0
    %1099 = vmatprep.subr.mxu0 0.0
    %1100 = vmatpush2.msra.mxu0 0.0
    %1101 = vmatprep.subr.mxu0 0.0
    %1102 = vmatpush2.msra.mxu0 0.0
    %1103 = vmatprep.subr.mxu0 0.0
    %1104 = vmatpush2.msra.mxu0 0.0
    %1105 = vmatprep.subr.mxu0 0.0
    %1106 = vmatpush2.msra.mxu0 0.0
    %1107 = vmatprep.subr.mxu0 0.0
    %1108 = vmatpush2.msra.mxu0 0.0
    %1109 = vmatprep.subr.mxu0 0.0
    %1110 = vmatpush2.msra.mxu0 0.0
    %1111 = vmatprep.mubr.f32.mxu0 0.0
    %1112 = vmatmul.mubr.f32.gmra.mxu0 %v974
    %v1113 = vpop.f32.mrf.mxu0
    %v1114 = vadd.f32 0.0, %v1113
    %v1115 = vpop.f32.mrf.mxu0
    %v1116 = vadd.f32 0.0, %v1115
    %1117 = vdwg.mxu0
    %v1122 = vrot.slane %v1043, 2
    %v1123 = vrot.slane %v1045, 2
    %v1124 = vrot.slane %v1114, 2
    %v1125 = vrot.slane %v1116, 2
    %v1130 = vadd.f32 %v313, %v1122
    %v1131 = vadd.f32 %v315, %v1123
    %v1132 = vadd.f32 %v356, %v1124
    %v1133 = vadd.f32 %v358, %v1125
    %v1134 = vxor.u32 %v1130, 2147483648
    %v1135 = vmul.f32 %v1134, 1.442695
    %v1136 = vpow.pop %v1135
    %v1137 = vadd.f32 %v1136, 1.0
    %v1138 = vrcp.pop %v1137
    %v1139 = vmul.f32 1.0, %v1138
    %v1140 = vxor.u32 %v1131, 2147483648
    %v1141 = vmul.f32 %v1140, 1.442695
    %v1142 = vpow.pop %v1141
    %v1143 = vadd.f32 %v1142, 1.0
    %v1144 = vrcp.pop %v1143
    %v1145 = vmul.f32 1.0, %v1144
    %v1146 = vtanh.pop %v1132
    %v1147 = vxor.u32 %v1133, 2147483648
    %v1148 = vmul.f32 %v1147, 1.442695
    %v1149 = vpow.pop %v1148
    %v1150 = vadd.f32 %v1149, 1.0
    %v1151 = vrcp.pop %v1150
    %v1152 = vmul.f32 1.0, %v1151
    %v1154 = vrot.slane %v970, 6
    %v1156 = vmul.f32 %v1145, %v1154
    %v1157 = vmul.f32 %v1139, %v1146
    %v1158 = vadd.f32 %v1156, %v1157
    %v1159 = vtanh.pop %v1158
    %v1160 = vmul.f32 %v1152, %v1159
    %v1162 = vrot.slane %v1160, 6
    %1164 = vmatprep.subr.mxu0 %v427
    %1165 = vmatpush1.msra.mxu0 %v426
    %1166 = vmatprep.subr.mxu0 %v423
    %1167 = vmatpush1.msra.mxu0 %v422
    %1168 = vmatprep.subr.mxu0 %v419
    %1169 = vmatpush1.msra.mxu0 %v418
    %1170 = vmatprep.subr.mxu0 %v415
    %1171 = vmatpush1.msra.mxu0 %v414
    %1172 = vmatprep.subr.mxu0 %v411
    %1173 = vmatpush1.msra.mxu0 %v410
    %1174 = vmatprep.subr.mxu0 %v407
    %1175 = vmatpush1.msra.mxu0 %v406
    %1176 = vmatprep.subr.mxu0 %v403
    %1177 = vmatpush1.msra.mxu0 %v402
    %1178 = vmatprep.subr.mxu0 %v399
    %1179 = vmatpush1.msra.mxu0 %v398
    %1180 = vmatprep.subr.mxu0 %v395
    %1181 = vmatpush1.msra.mxu0 %v394
    %1182 = vmatprep.subr.mxu0 %v391
    %1183 = vmatpush1.msra.mxu0 %v390
    %1184 = vmatprep.subr.mxu0 %v387
    %1185 = vmatpush1.msra.mxu0 %v386
    %1186 = vmatprep.subr.mxu0 %v383
    %1187 = vmatpush1.msra.mxu0 %v382
    %1188 = vmatprep.subr.mxu0 %v379
    %1189 = vmatpush1.msra.mxu0 %v378
    %1190 = vmatprep.subr.mxu0 %v375
    %1191 = vmatpush1.msra.mxu0 %v374
    %1192 = vmatprep.subr.mxu0 %v371
    %1193 = vmatpush1.msra.mxu0 %v370
    %1194 = vmatprep.subr.mxu0 %v367
    %1195 = vmatpush1.msra.mxu0 %v366
    %1196 = vmatprep.subr.mxu0 0.0
    %1197 = vmatpush2.msra.mxu0 0.0
    %1198 = vmatprep.subr.mxu0 0.0
    %1199 = vmatpush2.msra.mxu0 0.0
    %1200 = vmatprep.subr.mxu0 0.0
    %1201 = vmatpush2.msra.mxu0 0.0
    %1202 = vmatprep.subr.mxu0 0.0
    %1203 = vmatpush2.msra.mxu0 0.0
    %1204 = vmatprep.subr.mxu0 0.0
    %1205 = vmatpush2.msra.mxu0 0.0
    %1206 = vmatprep.subr.mxu0 0.0
    %1207 = vmatpush2.msra.mxu0 0.0
    %1208 = vmatprep.subr.mxu0 0.0
    %1209 = vmatpush2.msra.mxu0 0.0
    %1210 = vmatprep.subr.mxu0 0.0
    %1211 = vmatpush2.msra.mxu0 0.0
    %1212 = vmatprep.subr.mxu0 0.0
    %1213 = vmatpush2.msra.mxu0 0.0
    %1214 = vmatprep.subr.mxu0 0.0
    %1215 = vmatpush2.msra.mxu0 0.0
    %1216 = vmatprep.subr.mxu0 0.0
    %1217 = vmatpush2.msra.mxu0 0.0
    %1218 = vmatprep.subr.mxu0 0.0
    %1219 = vmatpush2.msra.mxu0 0.0
    %1220 = vmatprep.subr.mxu0 0.0
    %1221 = vmatpush2.msra.mxu0 0.0
    %1222 = vmatprep.subr.mxu0 0.0
    %1223 = vmatpush2.msra.mxu0 0.0
    %1224 = vmatprep.subr.mxu0 0.0
    %1225 = vmatpush2.msra.mxu0 0.0
    %1226 = vmatprep.subr.mxu0 0.0
    %1227 = vmatpush2.msra.mxu0 0.0
    %1228 = vmatprep.mubr.f32.mxu0 0.0
    %1229 = vmatmul.mubr.f32.gmra.mxu0 %v1162
    %v1230 = vpop.f32.mrf.mxu0
    %v1231 = vadd.f32 0.0, %v1230
    %v1232 = vpop.f32.mrf.mxu0
    %v1233 = vadd.f32 0.0, %v1232
    %1234 = vdwg.mxu0
    %1235 = vmatprep.subr.mxu0 %v429
    %1236 = vmatpush1.msra.mxu0 %v428
    %1237 = vmatprep.subr.mxu0 %v425
    %1238 = vmatpush1.msra.mxu0 %v424
    %1239 = vmatprep.subr.mxu0 %v421
    %1240 = vmatpush1.msra.mxu0 %v420
    %1241 = vmatprep.subr.mxu0 %v417
    %1242 = vmatpush1.msra.mxu0 %v416
    %1243 = vmatprep.subr.mxu0 %v413
    %1244 = vmatpush1.msra.mxu0 %v412
    %1245 = vmatprep.subr.mxu0 %v409
    %1246 = vmatpush1.msra.mxu0 %v408
    %1247 = vmatprep.subr.mxu0 %v405
    %1248 = vmatpush1.msra.mxu0 %v404
    %1249 = vmatprep.subr.mxu0 %v401
    %1250 = vmatpush1.msra.mxu0 %v400
    %1251 = vmatprep.subr.mxu0 %v397
    %1252 = vmatpush1.msra.mxu0 %v396
    %1253 = vmatprep.subr.mxu0 %v393
    %1254 = vmatpush1.msra.mxu0 %v392
    %1255 = vmatprep.subr.mxu0 %v389
    %1256 = vmatpush1.msra.mxu0 %v388
    %1257 = vmatprep.subr.mxu0 %v385
    %1258 = vmatpush1.msra.mxu0 %v384
    %1259 = vmatprep.subr.mxu0 %v381
    %1260 = vmatpush1.msra.mxu0 %v380
    %1261 = vmatprep.subr.mxu0 %v377
    %1262 = vmatpush1.msra.mxu0 %v376
    %1263 = vmatprep.subr.mxu0 %v373
    %1264 = vmatpush1.msra.mxu0 %v372
    %1265 = vmatprep.subr.mxu0 %v369
    %1266 = vmatpush1.msra.mxu0 %v368
    %1267 = vmatprep.subr.mxu0 0.0
    %1268 = vmatpush2.msra.mxu0 0.0
    %1269 = vmatprep.subr.mxu0 0.0
    %1270 = vmatpush2.msra.mxu0 0.0
    %1271 = vmatprep.subr.mxu0 0.0
    %1272 = vmatpush2.msra.mxu0 0.0
    %1273 = vmatprep.subr.mxu0 0.0
    %1274 = vmatpush2.msra.mxu0 0.0
    %1275 = vmatprep.subr.mxu0 0.0
    %1276 = vmatpush2.msra.mxu0 0.0
    %1277 = vmatprep.subr.mxu0 0.0
    %1278 = vmatpush2.msra.mxu0 0.0
    %1279 = vmatprep.subr.mxu0 0.0
    %1280 = vmatpush2.msra.mxu0 0.0
    %1281 = vmatprep.subr.mxu0 0.0
    %1282 = vmatpush2.msra.mxu0 0.0
    %1283 = vmatprep.subr.mxu0 0.0
    %1284 = vmatpush2.msra.mxu0 0.0
    %1285 = vmatprep.subr.mxu0 0.0
    %1286 = vmatpush2.msra.mxu0 0.0
    %1287 = vmatprep.subr.mxu0 0.0
    %1288 = vmatpush2.msra.mxu0 0.0
    %1289 = vmatprep.subr.mxu0 0.0
    %1290 = vmatpush2.msra.mxu0 0.0
    %1291 = vmatprep.subr.mxu0 0.0
    %1292 = vmatpush2.msra.mxu0 0.0
    %1293 = vmatprep.subr.mxu0 0.0
    %1294 = vmatpush2.msra.mxu0 0.0
    %1295 = vmatprep.subr.mxu0 0.0
    %1296 = vmatpush2.msra.mxu0 0.0
    %1297 = vmatprep.subr.mxu0 0.0
    %1298 = vmatpush2.msra.mxu0 0.0
    %1299 = vmatprep.mubr.f32.mxu0 0.0
    %1300 = vmatmul.mubr.f32.gmra.mxu0 %v1162
    %v1301 = vpop.f32.mrf.mxu0
    %v1302 = vadd.f32 0.0, %v1301
    %v1303 = vpop.f32.mrf.mxu0
    %v1304 = vadd.f32 0.0, %v1303
    %1305 = vdwg.mxu0
    %v1306 = vadd.f32 %v317, %v1231
    %v1307 = vadd.f32 %v319, %v1233
    %v1308 = vadd.f32 %v360, %v1302
    %v1309 = vadd.f32 %v362, %v1304
    %v1310 = vxor.u32 %v1306, 2147483648
    %v1311 = vmul.f32 %v1310, 1.442695
    %v1312 = vpow.pop %v1311
    %v1313 = vadd.f32 %v1312, 1.0
    %v1314 = vrcp.pop %v1313
    %v1315 = vmul.f32 1.0, %v1314
    %v1316 = vxor.u32 %v1307, 2147483648
    %v1317 = vmul.f32 %v1316, 1.442695
    %v1318 = vpow.pop %v1317
    %v1319 = vadd.f32 %v1318, 1.0
    %v1320 = vrcp.pop %v1319
    %v1321 = vmul.f32 1.0, %v1320
    %v1322 = vtanh.pop %v1308
    %v1323 = vxor.u32 %v1309, 2147483648
    %v1324 = vmul.f32 %v1323, 1.442695
    %v1325 = vpow.pop %v1324
    %v1326 = vadd.f32 %v1325, 1.0
    %v1327 = vrcp.pop %v1326
    %v1328 = vmul.f32 1.0, %v1327
    %v1330 = vrot.slane %v1158, 6
    %v1332 = vmul.f32 %v1321, %v1330
    %v1333 = vmul.f32 %v1315, %v1322
    %v1334 = vadd.f32 %v1332, %v1333
    %v1335 = vtanh.pop %v1334
    %v1336 = vmul.f32 %v1328, %v1335
    %1337 = vmatprep.subr.mxu0 %v427
    %1338 = vmatpush1.msra.mxu0 %v426
    %1339 = vmatprep.subr.mxu0 %v423
    %1340 = vmatpush1.msra.mxu0 %v422
    %1341 = vmatprep.subr.mxu0 %v419
    %1342 = vmatpush1.msra.mxu0 %v418
    %1343 = vmatprep.subr.mxu0 %v415
    %1344 = vmatpush1.msra.mxu0 %v414
    %1345 = vmatprep.subr.mxu0 %v411
    %1346 = vmatpush1.msra.mxu0 %v410
    %1347 = vmatprep.subr.mxu0 %v407
    %1348 = vmatpush1.msra.mxu0 %v406
    %1349 = vmatprep.subr.mxu0 %v403
    %1350 = vmatpush1.msra.mxu0 %v402
    %1351 = vmatprep.subr.mxu0 %v399
    %1352 = vmatpush1.msra.mxu0 %v398
    %1353 = vmatprep.subr.mxu0 %v395
    %1354 = vmatpush1.msra.mxu0 %v394
    %1355 = vmatprep.subr.mxu0 %v391
    %1356 = vmatpush1.msra.mxu0 %v390
    %1357 = vmatprep.subr.mxu0 %v387
    %1358 = vmatpush1.msra.mxu0 %v386
    %1359 = vmatprep.subr.mxu0 %v383
    %1360 = vmatpush1.msra.mxu0 %v382
    %1361 = vmatprep.subr.mxu0 %v379
    %1362 = vmatpush1.msra.mxu0 %v378
    %1363 = vmatprep.subr.mxu0 %v375
    %1364 = vmatpush1.msra.mxu0 %v374
    %1365 = vmatprep.subr.mxu0 %v371
    %1366 = vmatpush1.msra.mxu0 %v370
    %1367 = vmatprep.subr.mxu0 %v367
    %1368 = vmatpush1.msra.mxu0 %v366
    %1369 = vmatprep.subr.mxu0 0.0
    %1370 = vmatpush2.msra.mxu0 0.0
    %1371 = vmatprep.subr.mxu0 0.0
    %1372 = vmatpush2.msra.mxu0 0.0
    %1373 = vmatprep.subr.mxu0 0.0
    %1374 = vmatpush2.msra.mxu0 0.0
    %1375 = vmatprep.subr.mxu0 0.0
    %1376 = vmatpush2.msra.mxu0 0.0
    %1377 = vmatprep.subr.mxu0 0.0
    %1378 = vmatpush2.msra.mxu0 0.0
    %1379 = vmatprep.subr.mxu0 0.0
    %1380 = vmatpush2.msra.mxu0 0.0
    %1381 = vmatprep.subr.mxu0 0.0
    %1382 = vmatpush2.msra.mxu0 0.0
    %1383 = vmatprep.subr.mxu0 0.0
    %1384 = vmatpush2.msra.mxu0 0.0
    %1385 = vmatprep.subr.mxu0 0.0
    %1386 = vmatpush2.msra.mxu0 0.0
    %1387 = vmatprep.subr.mxu0 0.0
    %1388 = vmatpush2.msra.mxu0 0.0
    %1389 = vmatprep.subr.mxu0 0.0
    %1390 = vmatpush2.msra.mxu0 0.0
    %1391 = vmatprep.subr.mxu0 0.0
    %1392 = vmatpush2.msra.mxu0 0.0
    %1393 = vmatprep.subr.mxu0 0.0
    %1394 = vmatpush2.msra.mxu0 0.0
    %1395 = vmatprep.subr.mxu0 0.0
    %1396 = vmatpush2.msra.mxu0 0.0
    %1397 = vmatprep.subr.mxu0 0.0
    %1398 = vmatpush2.msra.mxu0 0.0
    %1399 = vmatprep.subr.mxu0 0.0
    %1400 = vmatpush2.msra.mxu0 0.0
    %1401 = vmatprep.mubr.f32.mxu0 0.0
    %1402 = vmatmul.mubr.f32.gmra.mxu0 %v1336
    %v1403 = vpop.f32.mrf.mxu0
    %v1404 = vadd.f32 0.0, %v1403
    %v1405 = vpop.f32.mrf.mxu0
    %v1406 = vadd.f32 0.0, %v1405
    %1407 = vdwg.mxu0
    %1408 = vmatprep.subr.mxu0 %v429
    %1409 = vmatpush1.msra.mxu0 %v428
    %1410 = vmatprep.subr.mxu0 %v425
    %1411 = vmatpush1.msra.mxu0 %v424
    %1412 = vmatprep.subr.mxu0 %v421
    %1413 = vmatpush1.msra.mxu0 %v420
    %1414 = vmatprep.subr.mxu0 %v417
    %1415 = vmatpush1.msra.mxu0 %v416
    %1416 = vmatprep.subr.mxu0 %v413
    %1417 = vmatpush1.msra.mxu0 %v412
    %1418 = vmatprep.subr.mxu0 %v409
    %1419 = vmatpush1.msra.mxu0 %v408
    %1420 = vmatprep.subr.mxu0 %v405
    %1421 = vmatpush1.msra.mxu0 %v404
    %1422 = vmatprep.subr.mxu0 %v401
    %1423 = vmatpush1.msra.mxu0 %v400
    %1424 = vmatprep.subr.mxu0 %v397
    %1425 = vmatpush1.msra.mxu0 %v396
    %1426 = vmatprep.subr.mxu0 %v393
    %1427 = vmatpush1.msra.mxu0 %v392
    %1428 = vmatprep.subr.mxu0 %v389
    %1429 = vmatpush1.msra.mxu0 %v388
    %1430 = vmatprep.subr.mxu0 %v385
    %1431 = vmatpush1.msra.mxu0 %v384
    %1432 = vmatprep.subr.mxu0 %v381
    %1433 = vmatpush1.msra.mxu0 %v380
    %1434 = vmatprep.subr.mxu0 %v377
    %1435 = vmatpush1.msra.mxu0 %v376
    %1436 = vmatprep.subr.mxu0 %v373
    %1437 = vmatpush1.msra.mxu0 %v372
    %1438 = vmatprep.subr.mxu0 %v369
    %1439 = vmatpush1.msra.mxu0 %v368
    %1440 = vmatprep.subr.mxu0 0.0
    %1441 = vmatpush2.msra.mxu0 0.0
    %1442 = vmatprep.subr.mxu0 0.0
    %1443 = vmatpush2.msra.mxu0 0.0
    %1444 = vmatprep.subr.mxu0 0.0
    %1445 = vmatpush2.msra.mxu0 0.0
    %1446 = vmatprep.subr.mxu0 0.0
    %1447 = vmatpush2.msra.mxu0 0.0
    %1448 = vmatprep.subr.mxu0 0.0
    %1449 = vmatpush2.msra.mxu0 0.0
    %1450 = vmatprep.subr.mxu0 0.0
    %1451 = vmatpush2.msra.mxu0 0.0
    %1452 = vmatprep.subr.mxu0 0.0
    %1453 = vmatpush2.msra.mxu0 0.0
    %1454 = vmatprep.subr.mxu0 0.0
    %1455 = vmatpush2.msra.mxu0 0.0
    %1456 = vmatprep.subr.mxu0 0.0
    %1457 = vmatpush2.msra.mxu0 0.0
    %1458 = vmatprep.subr.mxu0 0.0
    %1459 = vmatpush2.msra.mxu0 0.0
    %1460 = vmatprep.subr.mxu0 0.0
    %1461 = vmatpush2.msra.mxu0 0.0
    %1462 = vmatprep.subr.mxu0 0.0
    %1463 = vmatpush2.msra.mxu0 0.0
    %1464 = vmatprep.subr.mxu0 0.0
    %1465 = vmatpush2.msra.mxu0 0.0
    %1466 = vmatprep.subr.mxu0 0.0
    %1467 = vmatpush2.msra.mxu0 0.0
    %1468 = vmatprep.subr.mxu0 0.0
    %1469 = vmatpush2.msra.mxu0 0.0
    %1470 = vmatprep.subr.mxu0 0.0
    %1471 = vmatpush2.msra.mxu0 0.0
    %1472 = vmatprep.mubr.f32.mxu0 0.0
    %1473 = vmatmul.mubr.f32.gmra.mxu0 %v1336
    %v1474 = vpop.f32.mrf.mxu0
    %v1475 = vadd.f32 0.0, %v1474
    %v1476 = vpop.f32.mrf.mxu0
    %v1477 = vadd.f32 0.0, %v1476
    %1478 = vdwg.mxu0
    %v1483 = vrot.slane %v1404, 6
    %v1484 = vrot.slane %v1406, 6
    %v1485 = vrot.slane %v1475, 6
    %v1486 = vrot.slane %v1477, 6
    %v1491 = vadd.f32 %v317, %v1483
    %v1492 = vadd.f32 %v319, %v1484
    %v1493 = vadd.f32 %v360, %v1485
    %v1494 = vadd.f32 %v362, %v1486
    %v1495 = vxor.u32 %v1491, 2147483648
    %v1496 = vmul.f32 %v1495, 1.442695
    %v1497 = vpow.pop %v1496
    %v1498 = vadd.f32 %v1497, 1.0
    %v1499 = vrcp.pop %v1498
    %v1500 = vmul.f32 1.0, %v1499
    %v1501 = vxor.u32 %v1492, 2147483648
    %v1502 = vmul.f32 %v1501, 1.442695
    %v1503 = vpow.pop %v1502
    %v1504 = vadd.f32 %v1503, 1.0
    %v1505 = vrcp.pop %v1504
    %v1506 = vmul.f32 1.0, %v1505
    %v1507 = vtanh.pop %v1493
    %v1508 = vxor.u32 %v1494, 2147483648
    %v1509 = vmul.f32 %v1508, 1.442695
    %v1510 = vpow.pop %v1509
    %v1511 = vadd.f32 %v1510, 1.0
    %v1512 = vrcp.pop %v1511
    %v1513 = vmul.f32 1.0, %v1512
    %v1515 = vrot.slane %v1334, 6
    %v1517 = vmul.f32 %v1506, %v1515
    %v1518 = vmul.f32 %v1500, %v1507
    %v1519 = vadd.f32 %v1517, %v1518
    %v1520 = vtanh.pop %v1519
    %v1521 = vmul.f32 %v1513, %v1520
    %v1523 = vrot.slane %v1521, 2
    %1525 = vmatprep.subr.mxu0 %v427
    %1526 = vmatpush1.msra.mxu0 %v426
    %1527 = vmatprep.subr.mxu0 %v423
    %1528 = vmatpush1.msra.mxu0 %v422
    %1529 = vmatprep.subr.mxu0 %v419
    %1530 = vmatpush1.msra.mxu0 %v418
    %1531 = vmatprep.subr.mxu0 %v415
    %1532 = vmatpush1.msra.mxu0 %v414
    %1533 = vmatprep.subr.mxu0 %v411
    %1534 = vmatpush1.msra.mxu0 %v410
    %1535 = vmatprep.subr.mxu0 %v407
    %1536 = vmatpush1.msra.mxu0 %v406
    %1537 = vmatprep.subr.mxu0 %v403
    %1538 = vmatpush1.msra.mxu0 %v402
    %1539 = vmatprep.subr.mxu0 %v399
    %1540 = vmatpush1.msra.mxu0 %v398
    %1541 = vmatprep.subr.mxu0 %v395
    %1542 = vmatpush1.msra.mxu0 %v394
    %1543 = vmatprep.subr.mxu0 %v391
    %1544 = vmatpush1.msra.mxu0 %v390
    %1545 = vmatprep.subr.mxu0 %v387
    %1546 = vmatpush1.msra.mxu0 %v386
    %1547 = vmatprep.subr.mxu0 %v383
    %1548 = vmatpush1.msra.mxu0 %v382
    %1549 = vmatprep.subr.mxu0 %v379
    %1550 = vmatpush1.msra.mxu0 %v378
    %1551 = vmatprep.subr.mxu0 %v375
    %1552 = vmatpush1.msra.mxu0 %v374
    %1553 = vmatprep.subr.mxu0 %v371
    %1554 = vmatpush1.msra.mxu0 %v370
    %1555 = vmatprep.subr.mxu0 %v367
    %1556 = vmatpush1.msra.mxu0 %v366
    %1557 = vmatprep.subr.mxu0 0.0
    %1558 = vmatpush2.msra.mxu0 0.0
    %1559 = vmatprep.subr.mxu0 0.0
    %1560 = vmatpush2.msra.mxu0 0.0
    %1561 = vmatprep.subr.mxu0 0.0
    %1562 = vmatpush2.msra.mxu0 0.0
    %1563 = vmatprep.subr.mxu0 0.0
    %1564 = vmatpush2.msra.mxu0 0.0
    %1565 = vmatprep.subr.mxu0 0.0
    %1566 = vmatpush2.msra.mxu0 0.0
    %1567 = vmatprep.subr.mxu0 0.0
    %1568 = vmatpush2.msra.mxu0 0.0
    %1569 = vmatprep.subr.mxu0 0.0
    %1570 = vmatpush2.msra.mxu0 0.0
    %1571 = vmatprep.subr.mxu0 0.0
    %1572 = vmatpush2.msra.mxu0 0.0
    %1573 = vmatprep.subr.mxu0 0.0
    %1574 = vmatpush2.msra.mxu0 0.0
    %1575 = vmatprep.subr.mxu0 0.0
    %1576 = vmatpush2.msra.mxu0 0.0
    %1577 = vmatprep.subr.mxu0 0.0
    %1578 = vmatpush2.msra.mxu0 0.0
    %1579 = vmatprep.subr.mxu0 0.0
    %1580 = vmatpush2.msra.mxu0 0.0
    %1581 = vmatprep.subr.mxu0 0.0
    %1582 = vmatpush2.msra.mxu0 0.0
    %1583 = vmatprep.subr.mxu0 0.0
    %1584 = vmatpush2.msra.mxu0 0.0
    %1585 = vmatprep.subr.mxu0 0.0
    %1586 = vmatpush2.msra.mxu0 0.0
    %1587 = vmatprep.subr.mxu0 0.0
    %1588 = vmatpush2.msra.mxu0 0.0
    %1589 = vmatprep.mubr.f32.mxu0 0.0
    %1590 = vmatmul.mubr.f32.gmra.mxu0 %v1523
    %v1591 = vpop.f32.mrf.mxu0
    %v1592 = vadd.f32 0.0, %v1591
    %v1593 = vpop.f32.mrf.mxu0
    %v1594 = vadd.f32 0.0, %v1593
    %1595 = vdwg.mxu0
    %1596 = vmatprep.subr.mxu0 %v429
    %1597 = vmatpush1.msra.mxu0 %v428
    %1598 = vmatprep.subr.mxu0 %v425
    %1599 = vmatpush1.msra.mxu0 %v424
    %1600 = vmatprep.subr.mxu0 %v421
    %1601 = vmatpush1.msra.mxu0 %v420
    %1602 = vmatprep.subr.mxu0 %v417
    %1603 = vmatpush1.msra.mxu0 %v416
    %1604 = vmatprep.subr.mxu0 %v413
    %1605 = vmatpush1.msra.mxu0 %v412
    %1606 = vmatprep.subr.mxu0 %v409
    %1607 = vmatpush1.msra.mxu0 %v408
    %1608 = vmatprep.subr.mxu0 %v405
    %1609 = vmatpush1.msra.mxu0 %v404
    %1610 = vmatprep.subr.mxu0 %v401
    %1611 = vmatpush1.msra.mxu0 %v400
    %1612 = vmatprep.subr.mxu0 %v397
    %1613 = vmatpush1.msra.mxu0 %v396
    %1614 = vmatprep.subr.mxu0 %v393
    %1615 = vmatpush1.msra.mxu0 %v392
    %1616 = vmatprep.subr.mxu0 %v389
    %1617 = vmatpush1.msra.mxu0 %v388
    %1618 = vmatprep.subr.mxu0 %v385
    %1619 = vmatpush1.msra.mxu0 %v384
    %1620 = vmatprep.subr.mxu0 %v381
    %1621 = vmatpush1.msra.mxu0 %v380
    %1622 = vmatprep.subr.mxu0 %v377
    %1623 = vmatpush1.msra.mxu0 %v376
    %1624 = vmatprep.subr.mxu0 %v373
    %1625 = vmatpush1.msra.mxu0 %v372
    %1626 = vmatprep.subr.mxu0 %v369
    %1627 = vmatpush1.msra.mxu0 %v368
    %1628 = vmatprep.subr.mxu0 0.0
    %1629 = vmatpush2.msra.mxu0 0.0
    %1630 = vmatprep.subr.mxu0 0.0
    %1631 = vmatpush2.msra.mxu0 0.0
    %1632 = vmatprep.subr.mxu0 0.0
    %1633 = vmatpush2.msra.mxu0 0.0
    %1634 = vmatprep.subr.mxu0 0.0
    %1635 = vmatpush2.msra.mxu0 0.0
    %1636 = vmatprep.subr.mxu0 0.0
    %1637 = vmatpush2.msra.mxu0 0.0
    %1638 = vmatprep.subr.mxu0 0.0
    %1639 = vmatpush2.msra.mxu0 0.0
    %1640 = vmatprep.subr.mxu0 0.0
    %1641 = vmatpush2.msra.mxu0 0.0
    %1642 = vmatprep.subr.mxu0 0.0
    %1643 = vmatpush2.msra.mxu0 0.0
    %1644 = vmatprep.subr.mxu0 0.0
    %1645 = vmatpush2.msra.mxu0 0.0
    %1646 = vmatprep.subr.mxu0 0.0
    %1647 = vmatpush2.msra.mxu0 0.0
    %1648 = vmatprep.subr.mxu0 0.0
    %1649 = vmatpush2.msra.mxu0 0.0
    %1650 = vmatprep.subr.mxu0 0.0
    %1651 = vmatpush2.msra.mxu0 0.0
    %1652 = vmatprep.subr.mxu0 0.0
    %1653 = vmatpush2.msra.mxu0 0.0
    %1654 = vmatprep.subr.mxu0 0.0
    %1655 = vmatpush2.msra.mxu0 0.0
    %1656 = vmatprep.subr.mxu0 0.0
    %1657 = vmatpush2.msra.mxu0 0.0
    %1658 = vmatprep.subr.mxu0 0.0
    %1659 = vmatpush2.msra.mxu0 0.0
    %1660 = vmatprep.mubr.f32.mxu0 0.0
    %1661 = vmatmul.mubr.f32.gmra.mxu0 %v1523
    %v1662 = vpop.f32.mrf.mxu0
    %v1663 = vadd.f32 0.0, %v1662
    %v1664 = vpop.f32.mrf.mxu0
    %v1665 = vadd.f32 0.0, %v1664
    %1666 = vdwg.mxu0
    %v1671 = vrot.slane %v1592, 4
    %v1672 = vrot.slane %v1594, 4
    %v1673 = vrot.slane %v1663, 4
    %v1674 = vrot.slane %v1665, 4
    %v1679 = vadd.f32 %v317, %v1671
    %v1680 = vadd.f32 %v319, %v1672
    %v1681 = vadd.f32 %v360, %v1673
    %v1682 = vadd.f32 %v362, %v1674
    %v1683 = vxor.u32 %v1679, 2147483648
    %v1684 = vmul.f32 %v1683, 1.442695
    %v1685 = vpow.pop %v1684
    %v1686 = vadd.f32 %v1685, 1.0
    %v1687 = vrcp.pop %v1686
    %v1688 = vmul.f32 1.0, %v1687
    %v1689 = vxor.u32 %v1680, 2147483648
    %v1690 = vmul.f32 %v1689, 1.442695
    %v1691 = vpow.pop %v1690
    %v1692 = vadd.f32 %v1691, 1.0
    %v1693 = vrcp.pop %v1692
    %v1694 = vmul.f32 1.0, %v1693
    %v1695 = vtanh.pop %v1681
    %v1696 = vxor.u32 %v1682, 2147483648
    %v1697 = vmul.f32 %v1696, 1.442695
    %v1698 = vpow.pop %v1697
    %v1699 = vadd.f32 %v1698, 1.0
    %v1700 = vrcp.pop %v1699
    %v1701 = vmul.f32 1.0, %v1700
    %v1703 = vrot.slane %v1519, 6
    %v1705 = vmul.f32 %v1694, %v1703
    %v1706 = vmul.f32 %v1688, %v1695
    %v1707 = vadd.f32 %v1705, %v1706
    %v1708 = vtanh.pop %v1707
    %v1709 = vmul.f32 %v1701, %v1708
    %v1711 = vrot.slane %v1709, 4
    %1713 = vmatprep.subr.mxu0 %v427
    %1714 = vmatpush1.msra.mxu0 %v426
    %1715 = vmatprep.subr.mxu0 %v423
    %1716 = vmatpush1.msra.mxu0 %v422
    %1717 = vmatprep.subr.mxu0 %v419
    %1718 = vmatpush1.msra.mxu0 %v418
    %1719 = vmatprep.subr.mxu0 %v415
    %1720 = vmatpush1.msra.mxu0 %v414
    %1721 = vmatprep.subr.mxu0 %v411
    %1722 = vmatpush1.msra.mxu0 %v410
    %1723 = vmatprep.subr.mxu0 %v407
    %1724 = vmatpush1.msra.mxu0 %v406
    %1725 = vmatprep.subr.mxu0 %v403
    %1726 = vmatpush1.msra.mxu0 %v402
    %1727 = vmatprep.subr.mxu0 %v399
    %1728 = vmatpush1.msra.mxu0 %v398
    %1729 = vmatprep.subr.mxu0 %v395
    %1730 = vmatpush1.msra.mxu0 %v394
    %1731 = vmatprep.subr.mxu0 %v391
    %1732 = vmatpush1.msra.mxu0 %v390
    %1733 = vmatprep.subr.mxu0 %v387
    %1734 = vmatpush1.msra.mxu0 %v386
    %1735 = vmatprep.subr.mxu0 %v383
    %1736 = vmatpush1.msra.mxu0 %v382
    %1737 = vmatprep.subr.mxu0 %v379
    %1738 = vmatpush1.msra.mxu0 %v378
    %1739 = vmatprep.subr.mxu0 %v375
    %1740 = vmatpush1.msra.mxu0 %v374
    %1741 = vmatprep.subr.mxu0 %v371
    %1742 = vmatpush1.msra.mxu0 %v370
    %1743 = vmatprep.subr.mxu0 %v367
    %1744 = vmatpush1.msra.mxu0 %v366
    %1745 = vmatprep.subr.mxu0 0.0
    %1746 = vmatpush2.msra.mxu0 0.0
    %1747 = vmatprep.subr.mxu0 0.0
    %1748 = vmatpush2.msra.mxu0 0.0
    %1749 = vmatprep.subr.mxu0 0.0
    %1750 = vmatpush2.msra.mxu0 0.0
    %1751 = vmatprep.subr.mxu0 0.0
    %1752 = vmatpush2.msra.mxu0 0.0
    %1753 = vmatprep.subr.mxu0 0.0
    %1754 = vmatpush2.msra.mxu0 0.0
    %1755 = vmatprep.subr.mxu0 0.0
    %1756 = vmatpush2.msra.mxu0 0.0
    %1757 = vmatprep.subr.mxu0 0.0
    %1758 = vmatpush2.msra.mxu0 0.0
    %1759 = vmatprep.subr.mxu0 0.0
    %1760 = vmatpush2.msra.mxu0 0.0
    %1761 = vmatprep.subr.mxu0 0.0
    %1762 = vmatpush2.msra.mxu0 0.0
    %1763 = vmatprep.subr.mxu0 0.0
    %1764 = vmatpush2.msra.mxu0 0.0
    %1765 = vmatprep.subr.mxu0 0.0
    %1766 = vmatpush2.msra.mxu0 0.0
    %1767 = vmatprep.subr.mxu0 0.0
    %1768 = vmatpush2.msra.mxu0 0.0
    %1769 = vmatprep.subr.mxu0 0.0
    %1770 = vmatpush2.msra.mxu0 0.0
    %1771 = vmatprep.subr.mxu0 0.0
    %1772 = vmatpush2.msra.mxu0 0.0
    %1773 = vmatprep.subr.mxu0 0.0
    %1774 = vmatpush2.msra.mxu0 0.0
    %1775 = vmatprep.subr.mxu0 0.0
    %1776 = vmatpush2.msra.mxu0 0.0
    %1777 = vmatprep.mubr.f32.mxu0 0.0
    %1778 = vmatmul.mubr.f32.gmra.mxu0 %v1711
    %v1779 = vpop.f32.mrf.mxu0
    %v1780 = vadd.f32 0.0, %v1779
    %v1781 = vpop.f32.mrf.mxu0
    %v1782 = vadd.f32 0.0, %v1781
    %1783 = vdwg.mxu0
    %1784 = vmatprep.subr.mxu0 %v429
    %1785 = vmatpush1.msra.mxu0 %v428
    %1786 = vmatprep.subr.mxu0 %v425
    %1787 = vmatpush1.msra.mxu0 %v424
    %1788 = vmatprep.subr.mxu0 %v421
    %1789 = vmatpush1.msra.mxu0 %v420
    %1790 = vmatprep.subr.mxu0 %v417
    %1791 = vmatpush1.msra.mxu0 %v416
    %1792 = vmatprep.subr.mxu0 %v413
    %1793 = vmatpush1.msra.mxu0 %v412
    %1794 = vmatprep.subr.mxu0 %v409
    %1795 = vmatpush1.msra.mxu0 %v408
    %1796 = vmatprep.subr.mxu0 %v405
    %1797 = vmatpush1.msra.mxu0 %v404
    %1798 = vmatprep.subr.mxu0 %v401
    %1799 = vmatpush1.msra.mxu0 %v400
    %1800 = vmatprep.subr.mxu0 %v397
    %1801 = vmatpush1.msra.mxu0 %v396
    %1802 = vmatprep.subr.mxu0 %v393
    %1803 = vmatpush1.msra.mxu0 %v392
    %1804 = vmatprep.subr.mxu0 %v389
    %1805 = vmatpush1.msra.mxu0 %v388
    %1806 = vmatprep.subr.mxu0 %v385
    %1807 = vmatpush1.msra.mxu0 %v384
    %1808 = vmatprep.subr.mxu0 %v381
    %1809 = vmatpush1.msra.mxu0 %v380
    %1810 = vmatprep.subr.mxu0 %v377
    %1811 = vmatpush1.msra.mxu0 %v376
    %1812 = vmatprep.subr.mxu0 %v373
    %1813 = vmatpush1.msra.mxu0 %v372
    %1814 = vmatprep.subr.mxu0 %v369
    %1815 = vmatpush1.msra.mxu0 %v368
    %1816 = vmatprep.subr.mxu0 0.0
    %1817 = vmatpush2.msra.mxu0 0.0
    %1818 = vmatprep.subr.mxu0 0.0
    %1819 = vmatpush2.msra.mxu0 0.0
    %1820 = vmatprep.subr.mxu0 0.0
    %1821 = vmatpush2.msra.mxu0 0.0
    %1822 = vmatprep.subr.mxu0 0.0
    %1823 = vmatpush2.msra.mxu0 0.0
    %1824 = vmatprep.subr.mxu0 0.0
    %1825 = vmatpush2.msra.mxu0 0.0
    %1826 = vmatprep.subr.mxu0 0.0
    %1827 = vmatpush2.msra.mxu0 0.0
    %1828 = vmatprep.subr.mxu0 0.0
    %1829 = vmatpush2.msra.mxu0 0.0
    %1830 = vmatprep.subr.mxu0 0.0
    %1831 = vmatpush2.msra.mxu0 0.0
    %1832 = vmatprep.subr.mxu0 0.0
    %1833 = vmatpush2.msra.mxu0 0.0
    %1834 = vmatprep.subr.mxu0 0.0
    %1835 = vmatpush2.msra.mxu0 0.0
    %1836 = vmatprep.subr.mxu0 0.0
    %1837 = vmatpush2.msra.mxu0 0.0
    %1838 = vmatprep.subr.mxu0 0.0
    %1839 = vmatpush2.msra.mxu0 0.0
    %1840 = vmatprep.subr.mxu0 0.0
    %1841 = vmatpush2.msra.mxu0 0.0
    %1842 = vmatprep.subr.mxu0 0.0
    %1843 = vmatpush2.msra.mxu0 0.0
    %1844 = vmatprep.subr.mxu0 0.0
    %1845 = vmatpush2.msra.mxu0 0.0
    %1846 = vmatprep.subr.mxu0 0.0
    %1847 = vmatpush2.msra.mxu0 0.0
    %1848 = vmatprep.mubr.f32.mxu0 0.0
    %1849 = vmatmul.mubr.f32.gmra.mxu0 %v1711
    %v1850 = vpop.f32.mrf.mxu0
    %v1851 = vadd.f32 0.0, %v1850
    %v1852 = vpop.f32.mrf.mxu0
    %v1853 = vadd.f32 0.0, %v1852
    %1854 = vdwg.mxu0
    %v1859 = vrot.slane %v1780, 2
    %v1860 = vrot.slane %v1782, 2
    %v1861 = vrot.slane %v1851, 2
    %v1862 = vrot.slane %v1853, 2
    %v1867 = vadd.f32 %v317, %v1859
    %v1868 = vadd.f32 %v319, %v1860
    %v1869 = vadd.f32 %v360, %v1861
    %v1870 = vadd.f32 %v362, %v1862
    %v1871 = vxor.u32 %v1867, 2147483648
    %v1872 = vmul.f32 %v1871, 1.442695
    %v1873 = vpow.pop %v1872
    %v1874 = vadd.f32 %v1873, 1.0
    %v1875 = vrcp.pop %v1874
    %v1876 = vmul.f32 1.0, %v1875
    %v1877 = vxor.u32 %v1868, 2147483648
    %v1878 = vmul.f32 %v1877, 1.442695
    %v1879 = vpow.pop %v1878
    %v1880 = vadd.f32 %v1879, 1.0
    %v1881 = vrcp.pop %v1880
    %v1882 = vmul.f32 1.0, %v1881
    %v1883 = vtanh.pop %v1869
    %v1884 = vxor.u32 %v1870, 2147483648
    %v1885 = vmul.f32 %v1884, 1.442695
    %v1886 = vpow.pop %v1885
    %v1887 = vadd.f32 %v1886, 1.0
    %v1888 = vrcp.pop %v1887
    %v1889 = vmul.f32 1.0, %v1888
    %v1891 = vrot.slane %v1707, 6
    %v1893 = vmul.f32 %v1882, %v1891
    %v1894 = vmul.f32 %v1876, %v1883
    %v1895 = vadd.f32 %v1893, %v1894
    %v1896 = vtanh.pop %v1895
    %v1897 = vmul.f32 %v1889, %v1896
    %vm1898 = vcmask 1041408
    %v1899 = vsel %vm1898, %v599, %v784
    %vm1900 = vcmask 1043456
    %v1901 = vsel %vm1900, %v1899, %v972
    %vm1902 = vcmask 1045504
    %v1903 = vsel %vm1902, %v1901, %v1160
    %v1904 = vsel %vm1898, %v1336, %v1521
    %v1905 = vsel %vm1900, %v1904, %v1709
    %v1906 = vsel %vm1902, %v1905, %v1897
    %v1907 = vpack.c.bf16 %v1906, %v1903
    %v1908 = vld [vmem:[#allocation7] sm:$0xf]
    %v1909 = vld [vmem:[#allocation7 + $0x4] sm:$0xf]
    %v1910 = vld [vmem:[#allocation7 + $0x8] sm:$0xf]
    %v1911 = vld [vmem:[#allocation7 + $0xc] sm:$0xf]
    %v1912 = vld [vmem:[#allocation7 + $0x10] sm:$0xf]
    %v1913 = vld [vmem:[#allocation7 + $0x14] sm:$0xf]
    %v1914 = vld [vmem:[#allocation7 + $0x18] sm:$0xf]
    %v1915 = vld [vmem:[#allocation7 + $0x1c] sm:$0xf]
    %v1916 = vld [vmem:[#allocation7 + $0x20] sm:$0xf]
    %v1917 = vld [vmem:[#allocation7 + $0x24] sm:$0xf]
    %v1918 = vld [vmem:[#allocation7 + $0x28] sm:$0xf]
    %v1919 = vld [vmem:[#allocation7 + $0x2c] sm:$0xf]
    %v1920 = vld [vmem:[#allocation7 + $0x30] sm:$0xf]
    %v1921 = vld [vmem:[#allocation7 + $0x34] sm:$0xf]
    %v1922 = vld [vmem:[#allocation7 + $0x38] sm:$0xf]
    %v1923 = vld [vmem:[#allocation7 + $0x3c] sm:$0xf]
    %v1924 = vld [vmem:[%s4] sm:$0x1]
    %v1926 = vlaneseq
    %v1927 = vshrl.u32 %v1926, 7
    %v1928 = vsub.s32 0, %v1927
    %v1929 = vrot.slane %v1924, %v1928
    %v1947 = vunpack.c.l.b16 %v1908
    %v1948 = vunpack.c.l.b16 %v1909
    %v1949 = vunpack.c.l.b16 %v1910
    %v1950 = vunpack.c.l.b16 %v1911
    %v1951 = vunpack.c.l.b16 %v1912
    %v1952 = vunpack.c.l.b16 %v1913
    %v1953 = vunpack.c.l.b16 %v1914
    %v1954 = vunpack.c.l.b16 %v1915
    %v1955 = vunpack.c.l.b16 %v1916
    %v1956 = vunpack.c.l.b16 %v1917
    %v1957 = vunpack.c.l.b16 %v1918
    %v1958 = vunpack.c.l.b16 %v1919
    %v1959 = vunpack.c.l.b16 %v1920
    %v1960 = vunpack.c.l.b16 %v1921
    %v1961 = vunpack.c.l.b16 %v1922
    %v1962 = vunpack.c.l.b16 %v1923
    %v1963 = vpack.c.b16 %v1948, %v1947
    %v1964 = vpack.c.b16 %v1950, %v1949
    %v1965 = vpack.c.b16 %v1952, %v1951
    %v1966 = vpack.c.b16 %v1954, %v1953
    %v1967 = vpack.c.b16 %v1956, %v1955
    %v1968 = vpack.c.b16 %v1958, %v1957
    %v1969 = vpack.c.b16 %v1960, %v1959
    %v1970 = vpack.c.b16 %v1962, %v1961
    %1979 = vmatprep.subr.bf16.mxu0 0
    %1980 = vmatpush1.bf16.msra.mxu0 %v1970
    %1981 = vmatprep.subr.bf16.mxu0 0
    %1982 = vmatpush1.bf16.msra.mxu0 %v1969
    %1983 = vmatprep.subr.bf16.mxu0 0
    %1984 = vmatpush1.bf16.msra.mxu0 %v1968
    %1985 = vmatprep.subr.bf16.mxu0 0
    %1986 = vmatpush1.bf16.msra.mxu0 %v1967
    %1987 = vmatprep.subr.bf16.mxu0 0
    %1988 = vmatpush1.bf16.msra.mxu0 %v1966
    %1989 = vmatprep.subr.bf16.mxu0 0
    %1990 = vmatpush1.bf16.msra.mxu0 %v1965
    %1991 = vmatprep.subr.bf16.mxu0 0
    %1992 = vmatpush1.bf16.msra.mxu0 %v1964
    %1993 = vmatprep.subr.bf16.mxu0 0
    %1994 = vmatpush1.bf16.msra.mxu0 %v1963
    %1995 = vmatprep.subr.bf16.mxu0 0
    %1996 = vmatpush2.bf16.msra.mxu0 0
    %1997 = vmatprep.subr.bf16.mxu0 0
    %1998 = vmatpush2.bf16.msra.mxu0 0
    %1999 = vmatprep.subr.bf16.mxu0 0
    %2000 = vmatpush2.bf16.msra.mxu0 0
    %2001 = vmatprep.subr.bf16.mxu0 0
    %2002 = vmatpush2.bf16.msra.mxu0 0
    %2003 = vmatprep.subr.bf16.mxu0 0
    %2004 = vmatpush2.bf16.msra.mxu0 0
    %2005 = vmatprep.subr.bf16.mxu0 0
    %2006 = vmatpush2.bf16.msra.mxu0 0
    %2007 = vmatprep.subr.bf16.mxu0 0
    %2008 = vmatpush2.bf16.msra.mxu0 0
    %2009 = vmatprep.subr.bf16.mxu0 0
    %2010 = vmatpush2.bf16.msra.mxu0 0
    %2011 = vmatprep.mubr.bf16.mxu0 0
    %2012 = vmatmul.mubr.bf16.gmra.mxu0 %v1907
    %v2013 = vpop.f32.mrf.mxu0
    %v2014 = vadd.f32 %v1929, %v2013
    %v2015 = vpop.f32.mrf.mxu0
    %v2016 = vpop.f32.mrf.mxu0
    %v2017 = vadd.f32 %v1929, %v2016
    %v2018 = vpop.f32.mrf.mxu0
    %2019 = vdwg.mxu0
    %2020 = vst [vmem:[#allocation8] sm:$0xff] %v2014
    %2021 = vst [vmem:[#allocation8 + $0x8] sm:$0xff] %v2017
    // Predicated region
    $region42: #{forward.1} parent=1 // pred_check
      _
    $region43: #{forward.1} parent=1 // pred_check_branch
      %2023 = sbr.rel (0) target = $region45
    $region44: #{forward.1} parent=1 // pred_region
      %s2025 = ssub.s32 256, 256
      %2026 = vsyncadd [#allocation4], %s2025
      %s2027 = sshll.u32 [#allocation8], 4
      %s2028 = int_to_ptr.vmem [resolvable:$true] %s2027
      %2033 = dma.vmem_to_hbm [thread:$0]  %s2028, 256, %s7, [#allocation4], 128, 128, 8
    $region45: #{forward.1} parent=1 // pred_fallthru
      _
    // Predicated region
    $region46: #{forward.1} parent=1 // pred_check
      _
    $region47: #{forward.1} parent=1 // pred_check_branch
      %2035 = sbr.rel (0) target = $region49
    $region48: #{forward.1} parent=1 // pred_region
      %2036 = dma.done [#allocation4], 256
    $region49: #{forward.1} parent=1 // pred_fallthru
      _
    %2037 = vsyncpa [#allocation3], 1
    %2038 = vsyncpa [#allocation6], 1
    %2039 = vsyncpa [#allocation4], 1

</llo_original>
